<compile_context>
chip_gen: v7x
topology: tpu7x:2x2x1
jax: 0.10.0
libtpu: 0.0.40
codegen_flags: <defaults>
</compile_context>

<pallas_src>
import functools

import numpy as np
import jax
import jax.numpy as jnp
from jax.experimental import pallas as pl
from jax.experimental.pallas import tpu as pltpu

LANE = 128
SUBLANE = 8
VMEM_LIMIT = 32 * 1024 * 1024   # safe scoped-VMEM request on v5e/v6e/v7x


def _round_up(n, m):
    return ((n + m - 1) // m) * m


def _pad_to(x, target_shape):
    return jnp.pad(x, [(0, t - s) for s, t in zip(x.shape, target_shape)])


# ----------------------------------------------------------------------------
# Fused kernel: per node tile, run all GCN conv layers on the diagonal A_hat
# block, mean-pool the graphs living in this tile, and apply the MLP head.
# ----------------------------------------------------------------------------
def _make_fused_kernel(num_layers):
    def kernel(*refs):
        a_ref, h_ref, pool_ref = refs[:3]         # bf16 tiles
        idx = 3
        conv = []
        for _ in range(num_layers):
            conv.append((refs[idx], refs[idx + 1]))   # (W bf16, b f32) resident
            idx += 2
        wl_ref, bl_ref, w2_ref, b2_ref = refs[idx:idx + 4]
        o_ref = refs[idx + 4]

        a = a_ref[...]                            # [tm, tm]   bf16 (diag block)
        h = h_ref[...]                            # [tm, C0p]  bf16
        for (w_ref, b_ref) in conv:
            # aggregate (bf16 x bf16 -> f32 acc), then bf16 weight matmul
            agg = jnp.dot(a, h, preferred_element_type=jnp.float32)
            z = jnp.dot(agg.astype(jnp.bfloat16), w_ref[...],
                        preferred_element_type=jnp.float32) + b_ref[...]
            h = jnp.maximum(z, 0.0).astype(jnp.bfloat16)

        # global mean pool for this tile's graphs (pool rows only touch this tile)
        g = jnp.dot(pool_ref[...], h, preferred_element_type=jnp.float32)
        zl = jnp.maximum(
            jnp.dot(g.astype(jnp.bfloat16), wl_ref[...],
                    preferred_element_type=jnp.float32) + bl_ref[...], 0.0)
        o_ref[...] = (jnp.dot(zl.astype(jnp.bfloat16), w2_ref[...],
                              preferred_element_type=jnp.float32)
                      + b2_ref[...])
    return kernel


@functools.partial(jax.jit, static_argnames=("tm",))
def gcn_pallas_forward(a_p, h_p, pool_p, rows, conv_params_p, head_params_p,
                       *, tm=128):
    n_pad = a_p.shape[0]
    num_tiles = n_pad // tm
    gp_pad = pool_p.shape[0] // num_tiles
    (wl_p, bl_p), (w2_p, b2_p) = head_params_p
    out_pad = w2_p.shape[1]

    def const(shape):
        return pl.BlockSpec(shape, lambda i: (0, 0))    # resident across grid

    in_specs = [
        pl.BlockSpec((tm, tm), lambda i: (i, i)),                 # diagonal A
        pl.BlockSpec((tm, h_p.shape[1]), lambda i: (i, 0)),       # node feats
        pl.BlockSpec((gp_pad, tm), lambda i: (i, i)),             # pool block
    ]
    flat = [a_p, h_p, pool_p]
    for (w, b) in conv_params_p:
        in_specs += [const(w.shape), const(b.shape)]
        flat += [w, b]
    for arr in (wl_p, bl_p, w2_p, b2_p):
        in_specs.append(const(arr.shape))
        flat.append(arr)

    out = pl.pallas_call(
        _make_fused_kernel(len(conv_params_p)),
        out_shape=jax.ShapeDtypeStruct((num_tiles * gp_pad, out_pad),
                                       jnp.float32),
        grid_spec=pltpu.PrefetchScalarGridSpec(
            num_scalar_prefetch=0,
            grid=(num_tiles,),
            in_specs=in_specs,
            out_specs=pl.BlockSpec((gp_pad, out_pad), lambda i: (i, 0)),
        ),
        compiler_params=pltpu.CompilerParams(
            dimension_semantics=("parallel",),
            vmem_limit_bytes=VMEM_LIMIT,
        ),
    )(*flat)
    return out[rows]    # [num_graphs, out_pad]; caller slices real columns


# ----------------------------------------------------------------------------
# One-time (outside jit) preprocessing: adjacency, pool blocks, padded params.
# ----------------------------------------------------------------------------
def build_normalized_adjacency(edge_index, num_nodes):
    src, dst = edge_index[0], edge_index[1]
    a = jnp.zeros((num_nodes, num_nodes), jnp.float32)
    a = a.at[dst, src].add(1.0)                      # message flows src -> dst
    a = a + jnp.eye(num_nodes, dtype=jnp.float32)    # self loops
    deg = jnp.sum(a, axis=1)
    d_inv_sqrt = jnp.where(deg > 0, 1.0 / jnp.sqrt(deg), 0.0)
    return d_inv_sqrt[:, None] * a * d_inv_sqrt[None, :]


def build_pool_blocks(batch_map, num_graphs, n_pad, tm):
    """Per-tile mean-pool matrix laid out as [num_tiles*gp_pad, n_pad]."""
    batch_np = np.asarray(batch_map)
    n = batch_np.shape[0]
    num_tiles = n_pad // tm
    raw_counts = np.bincount(batch_np, minlength=num_graphs)
    assert np.all(raw_counts > 0), "every graph needs at least one node"
    counts = np.maximum(raw_counts.astype(np.float64), 1.0)

    node_idx = np.arange(n)
    first = np.full((num_graphs,), n, np.int64)
    np.minimum.at(first, batch_np, node_idx)
    last = np.zeros((num_graphs,), np.int64)
    np.maximum.at(last, batch_np, node_idx)
    tiles = first // tm
    assert np.all(last // tm == tiles), "each graph must fit inside one node tile"

    slot = np.zeros((num_graphs,), np.int64)
    next_slot = np.zeros((num_tiles,), np.int64)
    for g in range(num_graphs):
        slot[g] = next_slot[tiles[g]]
        next_slot[tiles[g]] += 1
    gp_pad = _round_up(max(int(next_slot.max()), 1), SUBLANE)
    rows = tiles * gp_pad + slot

    pool = np.zeros((num_tiles * gp_pad, n_pad), np.float32)
    pool[rows[batch_np], node_idx] = 1.0 / counts[batch_np]
    return jnp.asarray(pool), jnp.asarray(rows)


def prepare_graph(x, edge_index, batch_map, num_graphs, *, tm=128):
    n = x.shape[0]
    n_pad = _round_up(n, tm)
    src_np, dst_np = np.asarray(edge_index[0]), np.asarray(edge_index[1])
    assert np.all(src_np // tm == dst_np // tm), \
        "edges must not cross node tiles (block-diagonal A_hat assumption)"

    a = build_normalized_adjacency(edge_index, n)
    a_p = _pad_to(a, (n_pad, n_pad)).astype(jnp.bfloat16)
    c0_pad = _round_up(x.shape[1], LANE)
    h_p = _pad_to(x.astype(jnp.float32), (n_pad, c0_pad)).astype(jnp.bfloat16)
    pool_p, rows = build_pool_blocks(batch_map, num_graphs, n_pad, tm)
    return a_p, h_p, pool_p.astype(jnp.bfloat16), rows


def prepare_params(conv_params, lin_params):
    conv_p = []
    for (w, b) in conv_params:
        cin_pad = _round_up(w.shape[0], LANE)
        cout_pad = _round_up(w.shape[1], LANE)
        conv_p.append((
            _pad_to(w.astype(jnp.float32), (cin_pad, cout_pad)).astype(jnp.bfloat16),
            _pad_to(b.astype(jnp.float32).reshape(1, -1), (1, cout_pad)),
        ))
    (wl, bl), (w2, b2) = lin_params
    clast_pad = conv_p[-1][0].shape[1]
    hid_pad = _round_up(wl.shape[1], LANE)
    out_pad = _round_up(w2.shape[1], LANE)
    wl_p = _pad_to(wl.astype(jnp.float32), (clast_pad, hid_pad)).astype(jnp.bfloat16)
    bl_p = _pad_to(bl.astype(jnp.float32).reshape(1, -1), (1, hid_pad))
    w2_p = _pad_to(w2.astype(jnp.float32), (hid_pad, out_pad)).astype(jnp.bfloat16)
    b2_p = _pad_to(b2.astype(jnp.float32).reshape(1, -1), (1, out_pad))
    return tuple(conv_p), ((wl_p, bl_p), (w2_p, b2_p))


# ----------------------------------------------------------------------------
# Deterministic parameter init (shapes from the module's __init__).
# ----------------------------------------------------------------------------
def init_params(key, in_channels, layer_config):
    conv_params = []
    c_in = in_channels
    for cfg in layer_config:
        c_out = cfg['out_channels']
        key, kw, kb = jax.random.split(key, 3)
        w = jax.random.normal(kw, (c_in, c_out), jnp.float32) * 0.1
        b = jax.random.normal(kb, (1, c_out), jnp.float32) * 0.05
        conv_params.append((w, b))
        c_in = c_out
    key, k1, k2, k3, k4 = jax.random.split(key, 5)
    wl = jax.random.normal(k1, (c_in, 128), jnp.float32) * 0.1
    bl = jax.random.normal(k3, (1, 128), jnp.float32) * 0.05
    w2 = jax.random.normal(k2, (128, 1), jnp.float32) * 0.1
    b2 = jax.random.normal(k4, (1, 1), jnp.float32) * 0.05
    return conv_params, [(wl, bl), (w2, b2)]


# Pure-JAX reference using the same bf16-in / f32-accumulate dtype pipeline.
def gcn_reference(x, a_hat, batch_map, num_graphs, conv_params, lin_params):
    a_bf = a_hat.astype(jnp.bfloat16)
    h = x.astype(jnp.bfloat16)
    for (w, b) in conv_params:
        agg = jnp.dot(a_bf, h, preferred_element_type=jnp.float32)
        z = jnp.dot(agg.astype(jnp.bfloat16), w.astype(jnp.bfloat16),
                    preferred_element_type=jnp.float32) + b
        h = jnp.maximum(z, 0.0).astype(jnp.bfloat16)
    onehot = (batch_map[None, :] == jnp.arange(num_graphs)[:, None]).astype(jnp.float32)
    pool = (onehot / jnp.maximum(onehot.sum(1, keepdims=True), 1.0)).astype(jnp.bfloat16)
    g = jnp.dot(pool, h, preferred_element_type=jnp.float32)
    (wl, bl), (w2, b2) = lin_params
    zl = jnp.maximum(jnp.dot(g.astype(jnp.bfloat16), wl.astype(jnp.bfloat16),
                             preferred_element_type=jnp.float32) + bl, 0.0)
    return jnp.dot(zl.astype(jnp.bfloat16), w2.astype(jnp.bfloat16),
                   preferred_element_type=jnp.float32) + b2


if __name__ == "__main__":
    key = jax.random.PRNGKey(0)

    # Batch of small graphs, contiguous node numbering (tile-aligned).
    num_graphs = 8
    nodes_per_graph = 32
    num_nodes = num_graphs * nodes_per_graph          # 256 -> 2 node tiles
    in_channels = 16
    edges_per_graph = 64
    layer_config = [{'out_channels': 32}, {'out_channels': 64}]
    tm = 128    # node-tile size; use 256 on v6e/v7x for larger graphs

    key, kx, ke1, ke2 = jax.random.split(key, 4)
    x = jax.random.normal(kx, (num_nodes, in_channels), jnp.float32)
    offs = (jnp.arange(num_graphs) * nodes_per_graph)[:, None]
    src = (jax.random.randint(ke1, (num_graphs, edges_per_graph), 0,
                              nodes_per_graph) + offs).reshape(-1)
    dst = (jax.random.randint(ke2, (num_graphs, edges_per_graph), 0,
                              nodes_per_graph) + offs).reshape(-1)
    edge_index = jnp.stack([src, dst], axis=0)        # [2, E]
    batch_map = jnp.repeat(jnp.arange(num_graphs), nodes_per_graph)

    conv_params, lin_params = init_params(key, in_channels, layer_config)

    # One-time preprocessing (outside the jitted forward).
    a_p, h_p, pool_p, rows = prepare_graph(x, edge_index, batch_map,
                                           num_graphs, tm=tm)
    conv_p, head_p = prepare_params(conv_params, lin_params)

    out_padded = gcn_pallas_forward(a_p, h_p, pool_p, rows, conv_p, head_p,
                                    tm=tm)
    out = out_padded[:, :lin_params[1][0].shape[1]]   # real [num_graphs, 1]
    out = jax.block_until_ready(out)

    a_hat = build_normalized_adjacency(edge_index, num_nodes)
    ref = gcn_reference(x, a_hat, batch_map, num_graphs, conv_params,
                        lin_params)
    np.testing.assert_allclose(np.asarray(out), np.asarray(ref),
                               rtol=2e-2, atol=2e-2)
    print("KERNEL_OK")
</pallas_src>

<mosaic_0001>
module attributes {stable_mosaic.version = 11 : i64} {
  func.func @kernel(%arg0: i32, %arg1: memref<128x128xbf16, #tpu.memory_space<vmem>>, %arg2: memref<128x128xbf16, #tpu.memory_space<vmem>>, %arg3: memref<8x128xbf16, #tpu.memory_space<vmem>>, %arg4: memref<128x128xbf16, #tpu.memory_space<vmem>>, %arg5: memref<1x128xf32, #tpu.memory_space<vmem>>, %arg6: memref<128x128xbf16, #tpu.memory_space<vmem>>, %arg7: memref<1x128xf32, #tpu.memory_space<vmem>>, %arg8: memref<128x128xbf16, #tpu.memory_space<vmem>>, %arg9: memref<1x128xf32, #tpu.memory_space<vmem>>, %arg10: memref<128x128xbf16, #tpu.memory_space<vmem>>, %arg11: memref<1x128xf32, #tpu.memory_space<vmem>>, %arg12: memref<8x128xf32, #tpu.memory_space<vmem>>) attributes {dimension_semantics = [#tpu.dimension_semantics<parallel>], iteration_bounds = array<i64: 2>, scalar_prefetch = 0 : i64, scratch_operands = 0 : i64, tpu.core_type = #tpu.core_type<tc>, window_params = [{transform_indices = @transform_0, window_bounds = array<i64: 128, 128>}, {transform_indices = @transform_1, window_bounds = array<i64: 128, 128>}, {transform_indices = @transform_2, window_bounds = array<i64: 8, 128>}, {pipeline_mode = #tpu.pipeline_mode<synchronous>, transform_indices = @transform_3, window_bounds = array<i64: 128, 128>}, {pipeline_mode = #tpu.pipeline_mode<synchronous>, transform_indices = @transform_4, window_bounds = array<i64: 1, 128>}, {pipeline_mode = #tpu.pipeline_mode<synchronous>, transform_indices = @transform_5, window_bounds = array<i64: 128, 128>}, {pipeline_mode = #tpu.pipeline_mode<synchronous>, transform_indices = @transform_6, window_bounds = array<i64: 1, 128>}, {pipeline_mode = #tpu.pipeline_mode<synchronous>, transform_indices = @transform_7, window_bounds = array<i64: 128, 128>}, {pipeline_mode = #tpu.pipeline_mode<synchronous>, transform_indices = @transform_8, window_bounds = array<i64: 1, 128>}, {pipeline_mode = #tpu.pipeline_mode<synchronous>, transform_indices = @transform_9, window_bounds = array<i64: 128, 128>}, {pipeline_mode = #tpu.pipeline_mode<synchronous>, transform_indices = @transform_10, window_bounds = array<i64: 1, 128>}, {transform_indices = @transform_11, window_bounds = array<i64: 8, 128>}]} {
    %c0 = arith.constant 0 : index
    %c0_0 = arith.constant 0 : index
    %0 = vector.load %arg1[%c0, %c0_0] : memref<128x128xbf16, #tpu.memory_space<vmem>>, vector<128x128xbf16>
    %c0_1 = arith.constant 0 : index
    %c0_2 = arith.constant 0 : index
    %1 = vector.load %arg2[%c0_1, %c0_2] : memref<128x128xbf16, #tpu.memory_space<vmem>>, vector<128x128xbf16>
    %cst = arith.constant dense<0.000000e+00> : vector<128x128xf32>
    %2 = tpu.matmul %0, %1, %cst {dimension_numbers = #tpu.dot_dimension_numbers<[1], [0], [0], [1], [0, 0, 1, 1], [], []>} : vector<128x128xbf16>, vector<128x128xbf16>, vector<128x128xf32> -> vector<128x128xf32>
    %3 = arith.truncf %2 : vector<128x128xf32> to vector<128x128xbf16>
    %c0_3 = arith.constant 0 : index
    %c0_4 = arith.constant 0 : index
    %4 = vector.load %arg4[%c0_3, %c0_4] : memref<128x128xbf16, #tpu.memory_space<vmem>>, vector<128x128xbf16>
    %cst_5 = arith.constant dense<0.000000e+00> : vector<128x128xf32>
    %5 = tpu.matmul %3, %4, %cst_5 {dimension_numbers = #tpu.dot_dimension_numbers<[1], [0], [0], [1], [0, 0, 1, 1], [], []>} : vector<128x128xbf16>, vector<128x128xbf16>, vector<128x128xf32> -> vector<128x128xf32>
    %c0_6 = arith.constant 0 : index
    %c0_7 = arith.constant 0 : index
    %6 = vector.load %arg5[%c0_6, %c0_7] : memref<1x128xf32, #tpu.memory_space<vmem>>, vector<1x128xf32>
    %7 = vector.broadcast %6 : vector<1x128xf32> to vector<128x128xf32>
    %8 = arith.addf %5, %7 : vector<128x128xf32>
    %cst_8 = arith.constant 0.000000e+00 : f32
    %9 = vector.broadcast %cst_8 : f32 to vector<128x128xf32>
    %10 = arith.maximumf %8, %9 : vector<128x128xf32>
    %11 = arith.truncf %10 : vector<128x128xf32> to vector<128x128xbf16>
    %cst_9 = arith.constant dense<0.000000e+00> : vector<128x128xf32>
    %12 = tpu.matmul %0, %11, %cst_9 {dimension_numbers = #tpu.dot_dimension_numbers<[1], [0], [0], [1], [0, 0, 1, 1], [], []>} : vector<128x128xbf16>, vector<128x128xbf16>, vector<128x128xf32> -> vector<128x128xf32>
    %13 = arith.truncf %12 : vector<128x128xf32> to vector<128x128xbf16>
    %c0_10 = arith.constant 0 : index
    %c0_11 = arith.constant 0 : index
    %14 = vector.load %arg6[%c0_10, %c0_11] : memref<128x128xbf16, #tpu.memory_space<vmem>>, vector<128x128xbf16>
    %cst_12 = arith.constant dense<0.000000e+00> : vector<128x128xf32>
    %15 = tpu.matmul %13, %14, %cst_12 {dimension_numbers = #tpu.dot_dimension_numbers<[1], [0], [0], [1], [0, 0, 1, 1], [], []>} : vector<128x128xbf16>, vector<128x128xbf16>, vector<128x128xf32> -> vector<128x128xf32>
    %c0_13 = arith.constant 0 : index
    %c0_14 = arith.constant 0 : index
    %16 = vector.load %arg7[%c0_13, %c0_14] : memref<1x128xf32, #tpu.memory_space<vmem>>, vector<1x128xf32>
    %17 = vector.broadcast %16 : vector<1x128xf32> to vector<128x128xf32>
    %18 = arith.addf %15, %17 : vector<128x128xf32>
    %cst_15 = arith.constant 0.000000e+00 : f32
    %19 = vector.broadcast %cst_15 : f32 to vector<128x128xf32>
    %20 = arith.maximumf %18, %19 : vector<128x128xf32>
    %21 = arith.truncf %20 : vector<128x128xf32> to vector<128x128xbf16>
    %c0_16 = arith.constant 0 : index
    %c0_17 = arith.constant 0 : index
    %22 = vector.load %arg3[%c0_16, %c0_17] : memref<8x128xbf16, #tpu.memory_space<vmem>>, vector<8x128xbf16>
    %cst_18 = arith.constant dense<0.000000e+00> : vector<8x128xf32>
    %23 = tpu.matmul %22, %21, %cst_18 {dimension_numbers = #tpu.dot_dimension_numbers<[1], [0], [0], [1], [0, 0, 1, 1], [], []>} : vector<8x128xbf16>, vector<128x128xbf16>, vector<8x128xf32> -> vector<8x128xf32>
    %24 = arith.truncf %23 : vector<8x128xf32> to vector<8x128xbf16>
    %c0_19 = arith.constant 0 : index
    %c0_20 = arith.constant 0 : index
    %25 = vector.load %arg8[%c0_19, %c0_20] : memref<128x128xbf16, #tpu.memory_space<vmem>>, vector<128x128xbf16>
    %cst_21 = arith.constant dense<0.000000e+00> : vector<8x128xf32>
    %26 = tpu.matmul %24, %25, %cst_21 {dimension_numbers = #tpu.dot_dimension_numbers<[1], [0], [0], [1], [0, 0, 1, 1], [], []>} : vector<8x128xbf16>, vector<128x128xbf16>, vector<8x128xf32> -> vector<8x128xf32>
    %c0_22 = arith.constant 0 : index
    %c0_23 = arith.constant 0 : index
    %27 = vector.load %arg9[%c0_22, %c0_23] : memref<1x128xf32, #tpu.memory_space<vmem>>, vector<1x128xf32>
    %28 = vector.broadcast %27 : vector<1x128xf32> to vector<8x128xf32>
    %29 = arith.addf %26, %28 : vector<8x128xf32>
    %cst_24 = arith.constant 0.000000e+00 : f32
    %30 = vector.broadcast %cst_24 : f32 to vector<8x128xf32>
    %31 = arith.maximumf %29, %30 : vector<8x128xf32>
    %32 = arith.truncf %31 : vector<8x128xf32> to vector<8x128xbf16>
    %c0_25 = arith.constant 0 : index
    %c0_26 = arith.constant 0 : index
    %33 = vector.load %arg10[%c0_25, %c0_26] : memref<128x128xbf16, #tpu.memory_space<vmem>>, vector<128x128xbf16>
    %cst_27 = arith.constant dense<0.000000e+00> : vector<8x128xf32>
    %34 = tpu.matmul %32, %33, %cst_27 {dimension_numbers = #tpu.dot_dimension_numbers<[1], [0], [0], [1], [0, 0, 1, 1], [], []>} : vector<8x128xbf16>, vector<128x128xbf16>, vector<8x128xf32> -> vector<8x128xf32>
    %c0_28 = arith.constant 0 : index
    %c0_29 = arith.constant 0 : index
    %35 = vector.load %arg11[%c0_28, %c0_29] : memref<1x128xf32, #tpu.memory_space<vmem>>, vector<1x128xf32>
    %36 = vector.broadcast %35 : vector<1x128xf32> to vector<8x128xf32>
    %37 = arith.addf %34, %36 : vector<8x128xf32>
    %c0_30 = arith.constant 0 : index
    %c0_31 = arith.constant 0 : index
    %38 = vector.load %arg12[%c0_30, %c0_31] : memref<8x128xf32, #tpu.memory_space<vmem>>, vector<8x128xf32>
    tpu.vector_store %arg12[%c0_30, %c0_31], %37 {strides = array<i32>} : memref<8x128xf32, #tpu.memory_space<vmem>>, vector<8x128xf32>,
    return
  }
  func.func @transform_0(%arg0: i32) -> (i32, i32) {
    %c0_i32 = arith.constant 0 : i32
    return %arg0, %arg0 : i32, i32
  }
  func.func @transform_1(%arg0: i32) -> (i32, i32) {
    %c0_i32 = arith.constant 0 : i32
    %c0_i32_0 = arith.constant 0 : i32
    return %arg0, %c0_i32 : i32, i32
  }
  func.func @transform_2(%arg0: i32) -> (i32, i32) {
    %c0_i32 = arith.constant 0 : i32
    return %arg0, %arg0 : i32, i32
  }
  func.func @transform_3(%arg0: i32) -> (i32, i32) {
    %c0_i32 = arith.constant 0 : i32
    %c0_i32_0 = arith.constant 0 : i32
    %c0_i32_1 = arith.constant 0 : i32
    return %c0_i32, %c0_i32_0 : i32, i32
  }
  func.func @transform_4(%arg0: i32) -> (i32, i32) {
    %c0_i32 = arith.constant 0 : i32
    %c0_i32_0 = arith.constant 0 : i32
    %c0_i32_1 = arith.constant 0 : i32
    return %c0_i32, %c0_i32_0 : i32, i32
  }
  func.func @transform_5(%arg0: i32) -> (i32, i32) {
    %c0_i32 = arith.constant 0 : i32
    %c0_i32_0 = arith.constant 0 : i32
    %c0_i32_1 = arith.constant 0 : i32
    return %c0_i32, %c0_i32_0 : i32, i32
  }
  func.func @transform_6(%arg0: i32) -> (i32, i32) {
    %c0_i32 = arith.constant 0 : i32
    %c0_i32_0 = arith.constant 0 : i32
    %c0_i32_1 = arith.constant 0 : i32
    return %c0_i32, %c0_i32_0 : i32, i32
  }
  func.func @transform_7(%arg0: i32) -> (i32, i32) {
    %c0_i32 = arith.constant 0 : i32
    %c0_i32_0 = arith.constant 0 : i32
    %c0_i32_1 = arith.constant 0 : i32
    return %c0_i32, %c0_i32_0 : i32, i32
  }
  func.func @transform_8(%arg0: i32) -> (i32, i32) {
    %c0_i32 = arith.constant 0 : i32
    %c0_i32_0 = arith.constant 0 : i32
    %c0_i32_1 = arith.constant 0 : i32
    return %c0_i32, %c0_i32_0 : i32, i32
  }
  func.func @transform_9(%arg0: i32) -> (i32, i32) {
    %c0_i32 = arith.constant 0 : i32
    %c0_i32_0 = arith.constant 0 : i32
    %c0_i32_1 = arith.constant 0 : i32
    return %c0_i32, %c0_i32_0 : i32, i32
  }
  func.func @transform_10(%arg0: i32) -> (i32, i32) {
    %c0_i32 = arith.constant 0 : i32
    %c0_i32_0 = arith.constant 0 : i32
    %c0_i32_1 = arith.constant 0 : i32
    return %c0_i32, %c0_i32_0 : i32, i32
  }
  func.func @transform_11(%arg0: i32) -> (i32, i32) {
    %c0_i32 = arith.constant 0 : i32
    %c0_i32_0 = arith.constant 0 : i32
    return %arg0, %c0_i32 : i32, i32
  }
}

</mosaic_0001>

<llo_original>
// kernel: gcn_pallas_forward.1
$region0: #{gcn_pallas_forward.1}
  #allocation0 [shape = 'u32[]', space=smem, size = 0x4, offset = 0x4, fixed_abs, tag = 'smem constant byte address 0x4 - core index']
  #allocation1 [shape = 'u32[144,128]{1,0:T(1,128)}', space=vmem, size = 0x12000, scoped, tag = 'internal scratch']
  %s0 = inlined_call_operand.hbm [shape: bf16[256,256], index: 0, kind: input, shape index: {}]
  %s1 = inlined_call_operand.hbm [shape: bf16[256,128], index: 1, kind: input, shape index: {}]
  %s2 = inlined_call_operand.vmem [shape: bf16[16,256], index: 2, kind: input, shape index: {}]
  %s3 = inlined_call_operand.hbm [shape: bf16[128,128], index: 3, kind: input, shape index: {}]
  %s4 = inlined_call_operand.vmem [shape: f32[1,128], index: 4, kind: input, shape index: {}]
  %s5 = inlined_call_operand.hbm [shape: bf16[128,128], index: 5, kind: input, shape index: {}]
  %s6 = inlined_call_operand.vmem [shape: f32[1,128], index: 6, kind: input, shape index: {}]
  %s7 = inlined_call_operand.hbm [shape: bf16[128,128], index: 7, kind: input, shape index: {}]
  %s8 = inlined_call_operand.vmem [shape: f32[1,128], index: 8, kind: input, shape index: {}]
  %s9 = inlined_call_operand.hbm [shape: bf16[128,128], index: 9, kind: input, shape index: {}]
  %s10 = inlined_call_operand.vmem [shape: f32[1,128], index: 10, kind: input, shape index: {}]
  %s11 = inlined_call_operand.vmem [shape: f32[16,128], index: 11, kind: output, shape index: {}]
  %s12 = sld [smem:[#allocation0]]
  $region101: #{gcn_pallas_forward.1} parent=0
    _
  %s14 = ssub.s32 1, %s12
  %s15 = scalar_select 0, %s14, %s12
  $region1: #{gcn_pallas_forward.1} parent=0
    #allocation2 [shape = 'u8[65536]{0}', space=vmem, size = 0x10000, scoped, tag = 'input window, operand 0']
    #allocation3 [shape = 's32[2]{0}', space=sflag, size = 0x8, scoped, tag = 'scoped memory for gcn_pallas_forward.1']
    #allocation4 [shape = 'u8[65536]{0}', space=vmem, size = 0x10000, scoped, tag = 'input window, operand 1']
    #allocation5 [shape = 's32[2]{0}', space=sflag, size = 0x8, scoped, tag = 'scoped memory for gcn_pallas_forward.1']
    #allocation6 [shape = 'u8[32768]{0}', space=vmem, size = 0x8000, scoped, tag = 'input window, operand 3, single buffered']
    #allocation7 [shape = 'u8[32768]{0}', space=vmem, size = 0x8000, scoped, tag = 'input window, operand 5, single buffered']
    #allocation8 [shape = 's32[1]{0}', space=sflag, size = 0x4, scoped, tag = 'scoped memory for gcn_pallas_forward.1']
    #allocation9 [shape = 'u8[32768]{0}', space=vmem, size = 0x8000, scoped, tag = 'input window, operand 7, single buffered']
    #allocation10 [shape = 'u8[32768]{0}', space=vmem, size = 0x8000, scoped, tag = 'input window, operand 9, single buffered']
    #allocation11 [shape = 's32[1]{0}', space=sflag, size = 0x4, scoped, tag = 'scoped memory for gcn_pallas_forward.1']
    %16 = vsyncpa [#allocation3], 0
    %s17 = scalar_lea.sflag [#allocation3], 1
    %18 = vsyncpa %s17, 0
    %19 = vsyncpa [#allocation5], 0
    %s20 = scalar_lea.sflag [#allocation5], 1
    %21 = vsyncpa %s20, 0
    %22 = vsyncpa [#allocation8], 0
    %23 = vsyncpa [#allocation11], 0
    loop: start=0, step=1, limit=4
    $region2: #{gcn_pallas_forward.1} parent=1 // loop_pre_header
      _
    $region3: #{gcn_pallas_forward.1} parent=1 // loop_header
      %s25 = sphi 0, %s29
      %p26 = scmp.ge.s32.totalorder %s25, 4
      %s37 = sphi 0, %s39
      %s40 = sphi 0, %s37
      %s41 = sphi 0, %s40
      %s57 = sphi 0, %s41
      %s63 = sphi 0, %s65
      %s66 = sphi 0, %s63
      %s67 = sphi 0, %s66
      %s83 = sphi 0, %s67
      %s91 = sphi 0, %s93
      %s94 = sphi 0, %s91
      %s95 = sphi 0, %s94
      %s111 = sphi 0, %s95
      %s115 = sphi 0, %s115
      %s117 = sphi 0, %s115
      %s118 = sphi 0, %s117
      %s132 = sphi 0, %s118
      %s136 = sphi 0, %s136
      %s138 = sphi 0, %s136
      %s139 = sphi 0, %s138
      %s153 = sphi 0, %s139
      %s157 = sphi 0, %s157
      %s159 = sphi 0, %s157
      %s160 = sphi 0, %s159
      %s174 = sphi 0, %s160
      %s178 = sphi 0, %s178
      %s180 = sphi 0, %s178
      %s181 = sphi 0, %s180
      %s195 = sphi 0, %s181
      %s199 = sphi 0, %s199
      %s201 = sphi 0, %s199
      %s202 = sphi 0, %s201
      %s216 = sphi 0, %s202
      %s220 = sphi 0, %s220
      %s222 = sphi 0, %s220
      %s223 = sphi 0, %s222
      %s237 = sphi 0, %s223
      %s241 = sphi 0, %s241
      %s243 = sphi 0, %s241
      %s244 = sphi 0, %s243
      %s258 = sphi 0, %s244
      %s262 = sphi 0, %s262
      %s264 = sphi 0, %s262
      %s265 = sphi 0, %s264
      %s279 = sphi 0, %s265
      %s285 = sphi 0, %s287
      %s288 = sphi 0, %s285
      %s289 = sphi 0, %s288
      %s305 = sphi 0, %s289
    $region4: #{gcn_pallas_forward.1} parent=1 // loop_header_branch
      %28 = sbr.rel (%p26) target = $region8
    $region5: #{gcn_pallas_forward.1} parent=1 // loop_body
      %s30 = ssub.s32 %s25, 1
      %s31 = ssub.s32 %s25, 2
      %s32 = sadd.s32 %s25, 1
      %s33 = ssub.s32 %s25, %s32
      %s34 = ssub.s32 %s25, %s32
      %s35 = sor.u32 %s33, %s34
      %p36 = scmp.eq.s32.totalorder %s35, 0
      %s38 = sadd.s32 %s37, 1
      %s39 = scalar_select %p36, %s37, %s38
      %p42 = pneg %p36
      %p43 = scmp.eq.s32.totalorder %s25, 1
      %p44 = por %p42, %p43
      %p45 = scmp.ne.s32.totalorder %s37, %s40
      %p46 = scmp.eq.s32.totalorder %s25, 0
      %p47 = por %p45, %p46
      %p48 = scmp.ne.s32.totalorder %s37, %s40
      %p49 = scmp.eq.s32.totalorder %s30, 1
      %p50 = por %p48, %p49
      %p51 = scmp.ne.s32.totalorder %s40, %s41
      %p52 = scmp.eq.s32.totalorder %s30, 0
      %p53 = por %p51, %p52
      %p54 = scmp.ne.s32.totalorder %s40, %s41
      %p55 = scmp.eq.s32.totalorder %s31, 1
      %p56 = por %p54, %p55
      %p58 = scmp.ne.s32.totalorder %s41, %s57
      %p59 = scmp.eq.s32.totalorder %s31, 0
      %p60 = por %p58, %p59
      %s61 = ssub.s32 %s25, %s32
      %p62 = scmp.eq.s32.totalorder %s61, 0
      %s64 = sadd.s32 %s63, 1
      %s65 = scalar_select %p62, %s63, %s64
      %p68 = pneg %p62
      %p69 = scmp.eq.s32.totalorder %s25, 1
      %p70 = por %p68, %p69
      %p71 = scmp.ne.s32.totalorder %s63, %s66
      %p72 = scmp.eq.s32.totalorder %s25, 0
      %p73 = por %p71, %p72
      %p74 = scmp.ne.s32.totalorder %s63, %s66
      %p75 = scmp.eq.s32.totalorder %s30, 1
      %p76 = por %p74, %p75
      %p77 = scmp.ne.s32.totalorder %s66, %s67
      %p78 = scmp.eq.s32.totalorder %s30, 0
      %p79 = por %p77, %p78
      %p80 = scmp.ne.s32.totalorder %s66, %s67
      %p81 = scmp.eq.s32.totalorder %s31, 1
      %p82 = por %p80, %p81
      %p84 = scmp.ne.s32.totalorder %s67, %s83
      %p85 = scmp.eq.s32.totalorder %s31, 0
      %p86 = por %p84, %p85
      %s87 = ssub.s32 %s25, %s32
      %s88 = ssub.s32 %s25, %s32
      %s89 = sor.u32 %s87, %s88
      %p90 = scmp.eq.s32.totalorder %s89, 0
      %s92 = sadd.s32 %s91, 1
      %s93 = scalar_select %p90, %s91, %s92
      %p96 = pneg %p90
      %p97 = scmp.eq.s32.totalorder %s25, 1
      %p98 = por %p96, %p97
      %p99 = scmp.ne.s32.totalorder %s91, %s94
      %p100 = scmp.eq.s32.totalorder %s25, 0
      %p101 = por %p99, %p100
      %p102 = scmp.ne.s32.totalorder %s91, %s94
      %p103 = scmp.eq.s32.totalorder %s30, 1
      %p104 = por %p102, %p103
      %p105 = scmp.ne.s32.totalorder %s94, %s95
      %p106 = scmp.eq.s32.totalorder %s30, 0
      %p107 = por %p105, %p106
      %p108 = scmp.ne.s32.totalorder %s94, %s95
      %p109 = scmp.eq.s32.totalorder %s31, 1
      %p110 = por %p108, %p109
      %p112 = scmp.ne.s32.totalorder %s95, %s111
      %p113 = scmp.eq.s32.totalorder %s31, 0
      %p114 = por %p112, %p113
      %s116 = sadd.s32 %s115, 1
      %p119 = scmp.eq.s32.totalorder %s25, 1
      %p120 = scmp.ne.s32.totalorder %s115, %s117
      %p121 = scmp.eq.s32.totalorder %s25, 0
      %p122 = por %p120, %p121
      %p123 = scmp.ne.s32.totalorder %s115, %s117
      %p124 = scmp.eq.s32.totalorder %s30, 1
      %p125 = por %p123, %p124
      %p126 = scmp.ne.s32.totalorder %s117, %s118
      %p127 = scmp.eq.s32.totalorder %s30, 0
      %p128 = por %p126, %p127
      %p129 = scmp.ne.s32.totalorder %s117, %s118
      %p130 = scmp.eq.s32.totalorder %s31, 1
      %p131 = por %p129, %p130
      %p133 = scmp.ne.s32.totalorder %s118, %s132
      %p134 = scmp.eq.s32.totalorder %s31, 0
      %p135 = por %p133, %p134
      %s137 = sadd.s32 %s136, 1
      %p140 = scmp.eq.s32.totalorder %s25, 1
      %p141 = scmp.ne.s32.totalorder %s136, %s138
      %p142 = scmp.eq.s32.totalorder %s25, 0
      %p143 = por %p141, %p142
      %p144 = scmp.ne.s32.totalorder %s136, %s138
      %p145 = scmp.eq.s32.totalorder %s30, 1
      %p146 = por %p144, %p145
      %p147 = scmp.ne.s32.totalorder %s138, %s139
      %p148 = scmp.eq.s32.totalorder %s30, 0
      %p149 = por %p147, %p148
      %p150 = scmp.ne.s32.totalorder %s138, %s139
      %p151 = scmp.eq.s32.totalorder %s31, 1
      %p152 = por %p150, %p151
      %p154 = scmp.ne.s32.totalorder %s139, %s153
      %p155 = scmp.eq.s32.totalorder %s31, 0
      %p156 = por %p154, %p155
      %s158 = sadd.s32 %s157, 1
      %p161 = scmp.eq.s32.totalorder %s25, 1
      %p162 = scmp.ne.s32.totalorder %s157, %s159
      %p163 = scmp.eq.s32.totalorder %s25, 0
      %p164 = por %p162, %p163
      %p165 = scmp.ne.s32.totalorder %s157, %s159
      %p166 = scmp.eq.s32.totalorder %s30, 1
      %p167 = por %p165, %p166
      %p168 = scmp.ne.s32.totalorder %s159, %s160
      %p169 = scmp.eq.s32.totalorder %s30, 0
      %p170 = por %p168, %p169
      %p171 = scmp.ne.s32.totalorder %s159, %s160
      %p172 = scmp.eq.s32.totalorder %s31, 1
      %p173 = por %p171, %p172
      %p175 = scmp.ne.s32.totalorder %s160, %s174
      %p176 = scmp.eq.s32.totalorder %s31, 0
      %p177 = por %p175, %p176
      %s179 = sadd.s32 %s178, 1
      %p182 = scmp.eq.s32.totalorder %s25, 1
      %p183 = scmp.ne.s32.totalorder %s178, %s180
      %p184 = scmp.eq.s32.totalorder %s25, 0
      %p185 = por %p183, %p184
      %p186 = scmp.ne.s32.totalorder %s178, %s180
      %p187 = scmp.eq.s32.totalorder %s30, 1
      %p188 = por %p186, %p187
      %p189 = scmp.ne.s32.totalorder %s180, %s181
      %p190 = scmp.eq.s32.totalorder %s30, 0
      %p191 = por %p189, %p190
      %p192 = scmp.ne.s32.totalorder %s180, %s181
      %p193 = scmp.eq.s32.totalorder %s31, 1
      %p194 = por %p192, %p193
      %p196 = scmp.ne.s32.totalorder %s181, %s195
      %p197 = scmp.eq.s32.totalorder %s31, 0
      %p198 = por %p196, %p197
      %s200 = sadd.s32 %s199, 1
      %p203 = scmp.eq.s32.totalorder %s25, 1
      %p204 = scmp.ne.s32.totalorder %s199, %s201
      %p205 = scmp.eq.s32.totalorder %s25, 0
      %p206 = por %p204, %p205
      %p207 = scmp.ne.s32.totalorder %s199, %s201
      %p208 = scmp.eq.s32.totalorder %s30, 1
      %p209 = por %p207, %p208
      %p210 = scmp.ne.s32.totalorder %s201, %s202
      %p211 = scmp.eq.s32.totalorder %s30, 0
      %p212 = por %p210, %p211
      %p213 = scmp.ne.s32.totalorder %s201, %s202
      %p214 = scmp.eq.s32.totalorder %s31, 1
      %p215 = por %p213, %p214
      %p217 = scmp.ne.s32.totalorder %s202, %s216
      %p218 = scmp.eq.s32.totalorder %s31, 0
      %p219 = por %p217, %p218
      %s221 = sadd.s32 %s220, 1
      %p224 = scmp.eq.s32.totalorder %s25, 1
      %p225 = scmp.ne.s32.totalorder %s220, %s222
      %p226 = scmp.eq.s32.totalorder %s25, 0
      %p227 = por %p225, %p226
      %p228 = scmp.ne.s32.totalorder %s220, %s222
      %p229 = scmp.eq.s32.totalorder %s30, 1
      %p230 = por %p228, %p229
      %p231 = scmp.ne.s32.totalorder %s222, %s223
      %p232 = scmp.eq.s32.totalorder %s30, 0
      %p233 = por %p231, %p232
      %p234 = scmp.ne.s32.totalorder %s222, %s223
      %p235 = scmp.eq.s32.totalorder %s31, 1
      %p236 = por %p234, %p235
      %p238 = scmp.ne.s32.totalorder %s223, %s237
      %p239 = scmp.eq.s32.totalorder %s31, 0
      %p240 = por %p238, %p239
      %s242 = sadd.s32 %s241, 1
      %p245 = scmp.eq.s32.totalorder %s25, 1
      %p246 = scmp.ne.s32.totalorder %s241, %s243
      %p247 = scmp.eq.s32.totalorder %s25, 0
      %p248 = por %p246, %p247
      %p249 = scmp.ne.s32.totalorder %s241, %s243
      %p250 = scmp.eq.s32.totalorder %s30, 1
      %p251 = por %p249, %p250
      %p252 = scmp.ne.s32.totalorder %s243, %s244
      %p253 = scmp.eq.s32.totalorder %s30, 0
      %p254 = por %p252, %p253
      %p255 = scmp.ne.s32.totalorder %s243, %s244
      %p256 = scmp.eq.s32.totalorder %s31, 1
      %p257 = por %p255, %p256
      %p259 = scmp.ne.s32.totalorder %s244, %s258
      %p260 = scmp.eq.s32.totalorder %s31, 0
      %p261 = por %p259, %p260
      %s263 = sadd.s32 %s262, 1
      %p266 = scmp.eq.s32.totalorder %s25, 1
      %p267 = scmp.ne.s32.totalorder %s262, %s264
      %p268 = scmp.eq.s32.totalorder %s25, 0
      %p269 = por %p267, %p268
      %p270 = scmp.ne.s32.totalorder %s262, %s264
      %p271 = scmp.eq.s32.totalorder %s30, 1
      %p272 = por %p270, %p271
      %p273 = scmp.ne.s32.totalorder %s264, %s265
      %p274 = scmp.eq.s32.totalorder %s30, 0
      %p275 = por %p273, %p274
      %p276 = scmp.ne.s32.totalorder %s264, %s265
      %p277 = scmp.eq.s32.totalorder %s31, 1
      %p278 = por %p276, %p277
      %p280 = scmp.ne.s32.totalorder %s265, %s279
      %p281 = scmp.eq.s32.totalorder %s31, 0
      %p282 = por %p280, %p281
      %s283 = ssub.s32 %s25, %s32
      %p284 = scmp.eq.s32.totalorder %s283, 0
      %s286 = sadd.s32 %s285, 1
      %s287 = scalar_select %p284, %s285, %s286
      %p290 = pneg %p284
      %p291 = scmp.eq.s32.totalorder %s25, 1
      %p292 = por %p290, %p291
      %p293 = scmp.ne.s32.totalorder %s285, %s288
      %p294 = scmp.eq.s32.totalorder %s25, 0
      %p295 = por %p293, %p294
      %p296 = scmp.ne.s32.totalorder %s285, %s288
      %p297 = scmp.eq.s32.totalorder %s30, 1
      %p298 = por %p296, %p297
      %p299 = scmp.ne.s32.totalorder %s288, %s289
      %p300 = scmp.eq.s32.totalorder %s30, 0
      %p301 = por %p299, %p300
      %p302 = scmp.ne.s32.totalorder %s288, %s289
      %p303 = scmp.eq.s32.totalorder %s31, 1
      %p304 = por %p302, %p303
      %p306 = scmp.ne.s32.totalorder %s289, %s305
      %p307 = scmp.eq.s32.totalorder %s31, 0
      %p308 = por %p306, %p307
      %p309 = scmp.le.s32.totalorder 1, %s25
      %p310 = scmp.lt.s32.totalorder %s25, 3
      %p311 = pnand %p309, %p310
      %p312 = pneg %p311
      // Predicated region
      $region9: #{gcn_pallas_forward.1} parent=5 // pred_check
        _
      $region10: #{gcn_pallas_forward.1} parent=5 // pred_check_branch
        %314 = sbr.rel (%p311) target = $region12
      $region11: #{gcn_pallas_forward.1} parent=5 // pred_region
        %s315 = ssub.s32 %s25, 1
        // Predicated region
        $region13: #{gcn_pallas_forward.1} parent=11 // pred_check
          %p316 = pneg %p128
        $region14: #{gcn_pallas_forward.1} parent=11 // pred_check_branch
          %318 = sbr.rel (%p316) target = $region16
        $region15: #{gcn_pallas_forward.1} parent=11 // pred_region
          %s320 = ssub.s32 1024, 1024
          %321 = vsyncadd [#allocation5], %s320
          %s322 = sshll.u32 [#allocation6], 4
          %s323 = int_to_ptr.vmem [resolvable:$true] %s322
          %328 = dma.hbm_to_vmem [thread:$0]  %s3, 1024, %s323, [#allocation5], 64, 64, 4
        $region16: #{gcn_pallas_forward.1} parent=11 // pred_fallthru
          _
        // Predicated region
        $region17: #{gcn_pallas_forward.1} parent=11 // pred_check
          %p329 = pneg %p149
        $region18: #{gcn_pallas_forward.1} parent=11 // pred_check_branch
          %331 = sbr.rel (%p329) target = $region20
        $region19: #{gcn_pallas_forward.1} parent=11 // pred_region
          _
        $region20: #{gcn_pallas_forward.1} parent=11 // pred_fallthru
          _
        // Predicated region
        $region21: #{gcn_pallas_forward.1} parent=11 // pred_check
          %p332 = pneg %p170
        $region22: #{gcn_pallas_forward.1} parent=11 // pred_check_branch
          %334 = sbr.rel (%p332) target = $region24
        $region23: #{gcn_pallas_forward.1} parent=11 // pred_region
          %s336 = ssub.s32 1024, 1024
          %337 = vsyncadd [#allocation8], %s336
          %s338 = sshll.u32 [#allocation7], 4
          %s339 = int_to_ptr.vmem [resolvable:$true] %s338
          %344 = dma.hbm_to_vmem [thread:$0]  %s5, 1024, %s339, [#allocation8], 64, 64, 4
        $region24: #{gcn_pallas_forward.1} parent=11 // pred_fallthru
          _
        // Predicated region
        $region25: #{gcn_pallas_forward.1} parent=11 // pred_check
          %p345 = pneg %p191
        $region26: #{gcn_pallas_forward.1} parent=11 // pred_check_branch
          %347 = sbr.rel (%p345) target = $region28
        $region27: #{gcn_pallas_forward.1} parent=11 // pred_region
          _
        $region28: #{gcn_pallas_forward.1} parent=11 // pred_fallthru
          _
        // Predicated region
        $region29: #{gcn_pallas_forward.1} parent=11 // pred_check
          %p348 = pneg %p212
        $region30: #{gcn_pallas_forward.1} parent=11 // pred_check_branch
          %350 = sbr.rel (%p348) target = $region32
        $region31: #{gcn_pallas_forward.1} parent=11 // pred_region
          %s352 = ssub.s32 1024, 1024
          %353 = vsyncadd [#allocation8], %s352
          %s354 = sshll.u32 [#allocation9], 4
          %s355 = int_to_ptr.vmem [resolvable:$true] %s354
          %360 = dma.hbm_to_vmem [thread:$0]  %s7, 1024, %s355, [#allocation8], 64, 64, 4
        $region32: #{gcn_pallas_forward.1} parent=11 // pred_fallthru
          _
        // Predicated region
        $region33: #{gcn_pallas_forward.1} parent=11 // pred_check
          %p361 = pneg %p233
        $region34: #{gcn_pallas_forward.1} parent=11 // pred_check_branch
          %363 = sbr.rel (%p361) target = $region36
        $region35: #{gcn_pallas_forward.1} parent=11 // pred_region
          _
        $region36: #{gcn_pallas_forward.1} parent=11 // pred_fallthru
          _
        // Predicated region
        $region37: #{gcn_pallas_forward.1} parent=11 // pred_check
          %p364 = pneg %p254
        $region38: #{gcn_pallas_forward.1} parent=11 // pred_check_branch
          %366 = sbr.rel (%p364) target = $region40
        $region39: #{gcn_pallas_forward.1} parent=11 // pred_region
          %s368 = ssub.s32 1024, 1024
          %369 = vsyncadd [#allocation11], %s368
          %s370 = sshll.u32 [#allocation10], 4
          %s371 = int_to_ptr.vmem [resolvable:$true] %s370
          %376 = dma.hbm_to_vmem [thread:$0]  %s9, 1024, %s371, [#allocation11], 64, 64, 4
        $region40: #{gcn_pallas_forward.1} parent=11 // pred_fallthru
          _
        // Predicated region
        $region41: #{gcn_pallas_forward.1} parent=11 // pred_check
          %p377 = pneg %p275
        $region42: #{gcn_pallas_forward.1} parent=11 // pred_check_branch
          %379 = sbr.rel (%p377) target = $region44
        $region43: #{gcn_pallas_forward.1} parent=11 // pred_region
          _
        $region44: #{gcn_pallas_forward.1} parent=11 // pred_fallthru
          _
      $region12: #{gcn_pallas_forward.1} parent=5 // pred_fallthru
        _
      %p380 = scmp.lt.s32.totalorder %s25, 2
      // Predicated region
      $region45: #{gcn_pallas_forward.1} parent=5 // pred_check
        %p381 = pneg %p380
      $region46: #{gcn_pallas_forward.1} parent=5 // pred_check_branch
        %383 = sbr.rel (%p381) target = $region48
      $region47: #{gcn_pallas_forward.1} parent=5 // pred_region
        // Predicated region
        $region49: #{gcn_pallas_forward.1} parent=47 // pred_check
          %p384 = pneg %p47
        $region50: #{gcn_pallas_forward.1} parent=47 // pred_check_branch
          %386 = sbr.rel (%p384) target = $region52
        $region51: #{gcn_pallas_forward.1} parent=47 // pred_region
          %s387 = sand.u32 %s37, 1
          %s388 = scalar_lea.sflag [#allocation3], %s387
          %s389 = sand.u32 %s37, 1
          %s390 = smul.addr %s389, 64
          %s391 = scalar_lea.vmem [#allocation2], %s390
          %s392 = smul.u32 16, %s25
          %s394 = ssub.s32 1024, 1024
          %395 = vsyncadd %s388, %s394
          %s396 = smul.addr %s392, 2
          %s397 = sadd.s32 %s25, %s396
          %s398 = smul.addr %s397, 64
          %s399 = scalar_lea.hbm %s0, %s398
          %s400 = sshll.u32 %s391, 4
          %s401 = int_to_ptr.vmem [resolvable:$true] %s400
          %406 = dma.hbm_to_vmem [thread:$0]  %s399, 1024, %s401, %s388, 128, 64, 4
        $region52: #{gcn_pallas_forward.1} parent=47 // pred_fallthru
          _
        // Predicated region
        $region53: #{gcn_pallas_forward.1} parent=47 // pred_check
          %p407 = pneg %p73
        $region54: #{gcn_pallas_forward.1} parent=47 // pred_check_branch
          %409 = sbr.rel (%p407) target = $region56
        $region55: #{gcn_pallas_forward.1} parent=47 // pred_region
          %s410 = sand.u32 %s25, 1
          %s411 = scalar_lea.sflag [#allocation5], %s410
          %s412 = sand.u32 %s63, 1
          %s413 = smul.addr %s412, 64
          %s414 = scalar_lea.vmem [#allocation4], %s413
          %s415 = smul.u32 16, %s25
          %s417 = ssub.s32 1024, 1024
          %418 = vsyncadd %s411, %s417
          %s419 = smul.addr %s415, 64
          %s420 = scalar_lea.hbm %s1, %s419
          %s421 = sshll.u32 %s414, 4
          %s422 = int_to_ptr.vmem [resolvable:$true] %s421
          %427 = dma.hbm_to_vmem [thread:$0]  %s420, 1024, %s422, %s411, 64, 64, 4
        $region56: #{gcn_pallas_forward.1} parent=47 // pred_fallthru
          _
        // Predicated region
        $region57: #{gcn_pallas_forward.1} parent=47 // pred_check
          %p428 = pneg %p101
        $region58: #{gcn_pallas_forward.1} parent=47 // pred_check_branch
          %430 = sbr.rel (%p428) target = $region60
        $region59: #{gcn_pallas_forward.1} parent=47 // pred_region
          %p431 = scmp.lt.s32.totalorder %s25, 1
          %s432 = scalar_select %p431, %s25, 1
          %p433 = scmp.lt.s32.totalorder %s25, 1
          %s434 = scalar_select %p433, %s25, 1
          %s435 = smul.addr %s432, 2
          %s436 = sadd.s32 %s434, %s435
          %s437 = smul.addr %s436, 4
          %s438 = scalar_lea.vmem %s2, %s437
        $region60: #{gcn_pallas_forward.1} parent=47 // pred_fallthru
          _
      $region48: #{gcn_pallas_forward.1} parent=5 // pred_fallthru
        _
      %p439 = scmp.le.s32.totalorder 1, %s25
      %p440 = scmp.lt.s32.totalorder %s25, 3
      %p441 = pnand %p439, %p440
      %p442 = pneg %p441
      // Predicated region
      $region61: #{gcn_pallas_forward.1} parent=5 // pred_check
        _
      $region62: #{gcn_pallas_forward.1} parent=5 // pred_check_branch
        %444 = sbr.rel (%p441) target = $region64
      $region63: #{gcn_pallas_forward.1} parent=5 // pred_region
        %s445 = ssub.s32 %s25, 1
        %s446 = sand.u32 %s40, 1
        %s447 = scalar_lea.sflag [#allocation3], %s446
        %s448 = sand.u32 %s40, 1
        %s449 = smul.addr %s448, 64
        %s450 = scalar_lea.vmem [#allocation2], %s449
        // Predicated region
        $region65: #{gcn_pallas_forward.1} parent=63 // pred_check
          %p451 = pneg %p53
        $region66: #{gcn_pallas_forward.1} parent=63 // pred_check_branch
          %453 = sbr.rel (%p451) target = $region68
        $region67: #{gcn_pallas_forward.1} parent=63 // pred_region
          %454 = dma.done %s447, 1024
        $region68: #{gcn_pallas_forward.1} parent=63 // pred_fallthru
          _
        %s455 = sand.u32 %s30, 1
        %s456 = scalar_lea.sflag [#allocation5], %s455
        %s457 = sand.u32 %s66, 1
        %s458 = smul.addr %s457, 64
        %s459 = scalar_lea.vmem [#allocation4], %s458
        // Predicated region
        $region69: #{gcn_pallas_forward.1} parent=63 // pred_check
          %p460 = pneg %p79
        $region70: #{gcn_pallas_forward.1} parent=63 // pred_check_branch
          %462 = sbr.rel (%p460) target = $region72
        $region71: #{gcn_pallas_forward.1} parent=63 // pred_region
          %463 = dma.done %s456, 1024
        $region72: #{gcn_pallas_forward.1} parent=63 // pred_fallthru
          _
        // Predicated region
        $region73: #{gcn_pallas_forward.1} parent=63 // pred_check
          %p464 = pneg %p128
        $region74: #{gcn_pallas_forward.1} parent=63 // pred_check_branch
          %466 = sbr.rel (%p464) target = $region76
        $region75: #{gcn_pallas_forward.1} parent=63 // pred_region
          %467 = dma.done [#allocation5], 1024
        $region76: #{gcn_pallas_forward.1} parent=63 // pred_fallthru
          _
        // Predicated region
        $region77: #{gcn_pallas_forward.1} parent=63 // pred_check
          %p468 = pneg %p170
        $region78: #{gcn_pallas_forward.1} parent=63 // pred_check_branch
          %470 = sbr.rel (%p468) target = $region80
        $region79: #{gcn_pallas_forward.1} parent=63 // pred_region
          %471 = dma.done [#allocation8], 1024
        $region80: #{gcn_pallas_forward.1} parent=63 // pred_fallthru
          _
        // Predicated region
        $region81: #{gcn_pallas_forward.1} parent=63 // pred_check
          %p472 = pneg %p212
        $region82: #{gcn_pallas_forward.1} parent=63 // pred_check_branch
          %474 = sbr.rel (%p472) target = $region84
        $region83: #{gcn_pallas_forward.1} parent=63 // pred_region
          %475 = dma.done [#allocation8], 1024
        $region84: #{gcn_pallas_forward.1} parent=63 // pred_fallthru
          _
        // Predicated region
        $region85: #{gcn_pallas_forward.1} parent=63 // pred_check
          %p476 = pneg %p254
        $region86: #{gcn_pallas_forward.1} parent=63 // pred_check_branch
          %478 = sbr.rel (%p476) target = $region88
        $region87: #{gcn_pallas_forward.1} parent=63 // pred_region
          %479 = dma.done [#allocation11], 1024
        $region88: #{gcn_pallas_forward.1} parent=63 // pred_fallthru
          _
        %s480 = sand.u32 %s40, 1
        %s481 = scalar_lea.sflag [#allocation3], %s480
        %s482 = sand.u32 %s40, 1
        %s483 = smul.addr %s482, 64
        %s484 = scalar_lea.vmem [#allocation2], %s483
        %p485 = pneg %p53
        %p486 = pneg %p50
        %s487 = sand.u32 %s30, 1
        %s488 = scalar_lea.sflag [#allocation5], %s487
        %s489 = sand.u32 %s66, 1
        %s490 = smul.addr %s489, 64
        %s491 = scalar_lea.vmem [#allocation4], %s490
        %p492 = pneg %p79
        %p493 = pneg %p76
        %p494 = scmp.lt.s32.totalorder %s30, 1
        %s495 = scalar_select %p494, %s30, 1
        %p496 = scmp.lt.s32.totalorder %s30, 1
        %s497 = scalar_select %p496, %s30, 1
        %s498 = smul.addr %s495, 2
        %s499 = sadd.s32 %s497, %s498
        %s500 = smul.addr %s499, 4
        %s501 = scalar_lea.vmem %s2, %s500
        %p502 = pneg %p107
        %p503 = pneg %p104
        %p504 = pneg %p128
        %p505 = pneg %p125
        %p506 = pneg %p149
        %p507 = pneg %p146
        %p508 = pneg %p170
        %p509 = pneg %p167
        %p510 = pneg %p191
        %p511 = pneg %p188
        %p512 = pneg %p212
        %p513 = pneg %p209
        %p514 = pneg %p233
        %p515 = pneg %p230
        %p516 = pneg %p254
        %p517 = pneg %p251
        %p518 = pneg %p275
        %p519 = pneg %p272
        %p520 = pneg %p301
        %p521 = pneg %p298
        %p522 = scmp.lt.s32.totalorder %s30, 1
        %s523 = scalar_select %p522, %s30, 1
        %s524 = smul.addr %s523, 8
        %s525 = scalar_lea.vmem %s11, %s524
        %s526 = smul.u32 16, %s30
        %s527 = smul.u32 16, %s30
        %p528 = scmp.lt.s32.totalorder %s30, 1
        %s529 = scalar_select %p528, %s30, 1
        %p530 = scmp.lt.s32.totalorder %s30, 1
        %s531 = scalar_select %p530, %s30, 1
        %s532 = smul.addr %s529, 2
        %s533 = sadd.s32 %s531, %s532
        %s534 = smul.addr %s533, 4
        %s535 = scalar_lea.vmem %s2, %s534
        %p536 = scmp.lt.s32.totalorder %s30, 1
        %s537 = scalar_select %p536, %s30, 1
        %s538 = smul.addr %s537, 8
        %s539 = scalar_lea.vmem %s11, %s538
        %v541 = vld [vmem:[%s450] sm:$0xf]
        %v542 = vld [vmem:[%s450 + $0x4] sm:$0xf]
        %v543 = vld [vmem:[%s450 + $0x8] sm:$0xf]
        %v544 = vld [vmem:[%s450 + $0xc] sm:$0xf]
        %v545 = vld [vmem:[%s450 + $0x10] sm:$0xf]
        %v546 = vld [vmem:[%s450 + $0x14] sm:$0xf]
        %v547 = vld [vmem:[%s450 + $0x18] sm:$0xf]
        %v548 = vld [vmem:[%s450 + $0x1c] sm:$0xf]
        %v549 = vld [vmem:[%s450 + $0x20] sm:$0xf]
        %v550 = vld [vmem:[%s450 + $0x24] sm:$0xf]
        %v551 = vld [vmem:[%s450 + $0x28] sm:$0xf]
        %v552 = vld [vmem:[%s450 + $0x2c] sm:$0xf]
        %v553 = vld [vmem:[%s450 + $0x30] sm:$0xf]
        %v554 = vld [vmem:[%s450 + $0x34] sm:$0xf]
        %v555 = vld [vmem:[%s450 + $0x38] sm:$0xf]
        %v556 = vld [vmem:[%s450 + $0x3c] sm:$0xf]
        %v557 = vld [vmem:[%s459] sm:$0xf]
        %v558 = vld [vmem:[%s459 + $0x4] sm:$0xf]
        %v559 = vld [vmem:[%s459 + $0x8] sm:$0xf]
        %v560 = vld [vmem:[%s459 + $0xc] sm:$0xf]
        %v561 = vld [vmem:[%s459 + $0x10] sm:$0xf]
        %v562 = vld [vmem:[%s459 + $0x14] sm:$0xf]
        %v563 = vld [vmem:[%s459 + $0x18] sm:$0xf]
        %v564 = vld [vmem:[%s459 + $0x1c] sm:$0xf]
        %v565 = vld [vmem:[%s459 + $0x20] sm:$0xf]
        %v566 = vld [vmem:[%s459 + $0x24] sm:$0xf]
        %v567 = vld [vmem:[%s459 + $0x28] sm:$0xf]
        %v568 = vld [vmem:[%s459 + $0x2c] sm:$0xf]
        %v569 = vld [vmem:[%s459 + $0x30] sm:$0xf]
        %v570 = vld [vmem:[%s459 + $0x34] sm:$0xf]
        %v571 = vld [vmem:[%s459 + $0x38] sm:$0xf]
        %v572 = vld [vmem:[%s459 + $0x3c] sm:$0xf]
        %v589 = vunpack.c.l.b16 %v541
        %v590 = vunpack.c.l.b16 %v542
        %v591 = vunpack.c.l.b16 %v543
        %v592 = vunpack.c.l.b16 %v544
        %v593 = vunpack.c.l.b16 %v545
        %v594 = vunpack.c.l.b16 %v546
        %v595 = vunpack.c.l.b16 %v547
        %v596 = vunpack.c.l.b16 %v548
        %v597 = vunpack.c.l.b16 %v549
        %v598 = vunpack.c.l.b16 %v550
        %v599 = vunpack.c.l.b16 %v551
        %v600 = vunpack.c.l.b16 %v552
        %v601 = vunpack.c.l.b16 %v553
        %v602 = vunpack.c.l.b16 %v554
        %v603 = vunpack.c.l.b16 %v555
        %v604 = vunpack.c.l.b16 %v556
        %v605 = vpack.c.b16 %v590, %v589
        %v606 = vpack.c.b16 %v592, %v591
        %v607 = vpack.c.b16 %v594, %v593
        %v608 = vpack.c.b16 %v596, %v595
        %v609 = vpack.c.b16 %v598, %v597
        %v610 = vpack.c.b16 %v600, %v599
        %v611 = vpack.c.b16 %v602, %v601
        %v612 = vpack.c.b16 %v604, %v603
        %v637 = vunpack.c.l.b16 %v557
        %v638 = vunpack.c.l.b16 %v558
        %v639 = vunpack.c.l.b16 %v559
        %v640 = vunpack.c.l.b16 %v560
        %v641 = vunpack.c.l.b16 %v561
        %v642 = vunpack.c.l.b16 %v562
        %v643 = vunpack.c.l.b16 %v563
        %v644 = vunpack.c.l.b16 %v564
        %v645 = vunpack.c.l.b16 %v565
        %v646 = vunpack.c.l.b16 %v566
        %v647 = vunpack.c.l.b16 %v567
        %v648 = vunpack.c.l.b16 %v568
        %v649 = vunpack.c.l.b16 %v569
        %v650 = vunpack.c.l.b16 %v570
        %v651 = vunpack.c.l.b16 %v571
        %v652 = vunpack.c.l.b16 %v572
        %v653 = vpack.c.b16 %v638, %v637
        %v654 = vpack.c.b16 %v640, %v639
        %v655 = vpack.c.b16 %v642, %v641
        %v656 = vpack.c.b16 %v644, %v643
        %v657 = vpack.c.b16 %v646, %v645
        %v658 = vpack.c.b16 %v648, %v647
        %v659 = vpack.c.b16 %v650, %v649
        %v660 = vpack.c.b16 %v652, %v651
        %669 = vmatprep.subr.bf16.mxu0 0
        %670 = vmatpush1.bf16.msra.mxu0 %v653
        %671 = vmatprep.subr.bf16.mxu0 0
        %672 = vmatpush1.bf16.msra.mxu0 %v654
        %673 = vmatprep.subr.bf16.mxu0 0
        %674 = vmatpush1.bf16.msra.mxu0 %v655
        %675 = vmatprep.subr.bf16.mxu0 0
        %676 = vmatpush1.bf16.msra.mxu0 %v656
        %677 = vmatprep.subr.bf16.mxu0 0
        %678 = vmatpush1.bf16.msra.mxu0 %v657
        %679 = vmatprep.subr.bf16.mxu0 0
        %680 = vmatpush1.bf16.msra.mxu0 %v658
        %681 = vmatprep.subr.bf16.mxu0 0
        %682 = vmatpush1.bf16.msra.mxu0 %v659
        %683 = vmatprep.subr.bf16.mxu0 0
        %684 = vmatpush1.bf16.msra.mxu0 %v660
        %685 = vmatprep.subr.bf16.mxu0 0
        %686 = vmatpush1.bf16.msra.mxu0 0
        %687 = vmatprep.subr.bf16.mxu0 0
        %688 = vmatpush1.bf16.msra.mxu0 0
        %689 = vmatprep.subr.bf16.mxu0 0
        %690 = vmatpush1.bf16.msra.mxu0 0
        %691 = vmatprep.subr.bf16.mxu0 0
        %692 = vmatpush1.bf16.msra.mxu0 0
        %693 = vmatprep.subr.bf16.mxu0 0
        %694 = vmatpush1.bf16.msra.mxu0 0
        %695 = vmatprep.subr.bf16.mxu0 0
        %696 = vmatpush1.bf16.msra.mxu0 0
        %697 = vmatprep.subr.bf16.mxu0 0
        %698 = vmatpush1.bf16.msra.mxu0 0
        %699 = vmatprep.subr.bf16.mxu0 0
        %700 = vmatpush1.bf16.msra.mxu0 0
        %701 = vmatprep.mubr.bf16.mxu0 0
        %702 = vmatmul.mubr.bf16.gmra.mrb[0].mxu0 %v605
        %v703 = vpop.f32.mrb[0].mxu0
        %v704 = vadd.f32 0.0, %v703
        %v705 = vpop.f32.mrb[0].mxu0
        %v706 = vpop.f32.mrb[0].mxu0
        %v707 = vadd.f32 0.0, %v706
        %v708 = vpop.f32.mrb[0].mxu0
        %709 = vmatprep.mubr.bf16.mxu0 0
        %710 = vmatmul.mubr.bf16.gmra.mrb[0].mxu0 %v606
        %v711 = vpop.f32.mrb[0].mxu0
        %v712 = vadd.f32 0.0, %v711
        %v713 = vpop.f32.mrb[0].mxu0
        %v714 = vpop.f32.mrb[0].mxu0
        %v715 = vadd.f32 0.0, %v714
        %v716 = vpop.f32.mrb[0].mxu0
        %717 = vmatprep.mubr.bf16.mxu0 0
        %718 = vmatmul.mubr.bf16.gmra.mrb[0].mxu0 %v607
        %v719 = vpop.f32.mrb[0].mxu0
        %v720 = vadd.f32 0.0, %v719
        %v721 = vpop.f32.mrb[0].mxu0
        %v722 = vpop.f32.mrb[0].mxu0
        %v723 = vadd.f32 0.0, %v722
        %v724 = vpop.f32.mrb[0].mxu0
        %725 = vmatprep.mubr.bf16.mxu0 0
        %726 = vmatmul.mubr.bf16.gmra.mrb[0].mxu0 %v608
        %v727 = vpop.f32.mrb[0].mxu0
        %v728 = vadd.f32 0.0, %v727
        %v729 = vpop.f32.mrb[0].mxu0
        %v730 = vpop.f32.mrb[0].mxu0
        %v731 = vadd.f32 0.0, %v730
        %v732 = vpop.f32.mrb[0].mxu0
        %733 = vmatprep.mubr.bf16.mxu0 0
        %734 = vmatmul.mubr.bf16.gmra.mrb[0].mxu0 %v609
        %v735 = vpop.f32.mrb[0].mxu0
        %v736 = vadd.f32 0.0, %v735
        %v737 = vpop.f32.mrb[0].mxu0
        %v738 = vpop.f32.mrb[0].mxu0
        %v739 = vadd.f32 0.0, %v738
        %v740 = vpop.f32.mrb[0].mxu0
        %741 = vmatprep.mubr.bf16.mxu0 0
        %742 = vmatmul.mubr.bf16.gmra.mrb[0].mxu0 %v610
        %v743 = vpop.f32.mrb[0].mxu0
        %v744 = vadd.f32 0.0, %v743
        %v745 = vpop.f32.mrb[0].mxu0
        %v746 = vpop.f32.mrb[0].mxu0
        %v747 = vadd.f32 0.0, %v746
        %v748 = vpop.f32.mrb[0].mxu0
        %749 = vmatprep.mubr.bf16.mxu0 0
        %750 = vmatmul.mubr.bf16.gmra.mrb[0].mxu0 %v611
        %v751 = vpop.f32.mrb[0].mxu0
        %v752 = vadd.f32 0.0, %v751
        %v753 = vpop.f32.mrb[0].mxu0
        %v754 = vpop.f32.mrb[0].mxu0
        %v755 = vadd.f32 0.0, %v754
        %v756 = vpop.f32.mrb[0].mxu0
        %757 = vmatprep.mubr.bf16.mxu0 0
        %758 = vmatmul.mubr.bf16.gmra.mrb[0].mxu0 %v612
        %v759 = vpop.f32.mrb[0].mxu0
        %v760 = vadd.f32 0.0, %v759
        %v761 = vpop.f32.mrb[0].mxu0
        %v762 = vpop.f32.mrb[0].mxu0
        %v763 = vadd.f32 0.0, %v762
        %v764 = vpop.f32.mrb[0].mxu0
        %765 = vdwg.mxu0
        %v766 = vpack.c.bf16 %v707, %v704
        %v767 = vpack.c.bf16 %v715, %v712
        %v768 = vpack.c.bf16 %v723, %v720
        %v769 = vpack.c.bf16 %v731, %v728
        %v770 = vpack.c.bf16 %v739, %v736
        %v771 = vpack.c.bf16 %v747, %v744
        %v772 = vpack.c.bf16 %v755, %v752
        %v773 = vpack.c.bf16 %v763, %v760
        %v774 = vld [vmem:[#allocation6] sm:$0xf]
        %v775 = vld [vmem:[#allocation6 + $0x4] sm:$0xf]
        %v776 = vld [vmem:[#allocation6 + $0x8] sm:$0xf]
        %v777 = vld [vmem:[#allocation6 + $0xc] sm:$0xf]
        %v778 = vld [vmem:[#allocation6 + $0x10] sm:$0xf]
        %v779 = vld [vmem:[#allocation6 + $0x14] sm:$0xf]
        %v780 = vld [vmem:[#allocation6 + $0x18] sm:$0xf]
        %v781 = vld [vmem:[#allocation6 + $0x1c] sm:$0xf]
        %v782 = vld [vmem:[#allocation6 + $0x20] sm:$0xf]
        %v783 = vld [vmem:[#allocation6 + $0x24] sm:$0xf]
        %v784 = vld [vmem:[#allocation6 + $0x28] sm:$0xf]
        %v785 = vld [vmem:[#allocation6 + $0x2c] sm:$0xf]
        %v786 = vld [vmem:[#allocation6 + $0x30] sm:$0xf]
        %v787 = vld [vmem:[#allocation6 + $0x34] sm:$0xf]
        %v788 = vld [vmem:[#allocation6 + $0x38] sm:$0xf]
        %v789 = vld [vmem:[#allocation6 + $0x3c] sm:$0xf]
        %v790 = vld [vmem:[%s4] sm:$0x1]
        %v792 = vlaneseq
        %v793 = vshrl.u32 %v792, 7
        %v794 = vsub.s32 0, %v793
        %v795 = vrot.slane %v790, %v794
        %v813 = vunpack.c.l.b16 %v774
        %v814 = vunpack.c.l.b16 %v775
        %v815 = vunpack.c.l.b16 %v776
        %v816 = vunpack.c.l.b16 %v777
        %v817 = vunpack.c.l.b16 %v778
        %v818 = vunpack.c.l.b16 %v779
        %v819 = vunpack.c.l.b16 %v780
        %v820 = vunpack.c.l.b16 %v781
        %v821 = vunpack.c.l.b16 %v782
        %v822 = vunpack.c.l.b16 %v783
        %v823 = vunpack.c.l.b16 %v784
        %v824 = vunpack.c.l.b16 %v785
        %v825 = vunpack.c.l.b16 %v786
        %v826 = vunpack.c.l.b16 %v787
        %v827 = vunpack.c.l.b16 %v788
        %v828 = vunpack.c.l.b16 %v789
        %v829 = vpack.c.b16 %v814, %v813
        %v830 = vpack.c.b16 %v816, %v815
        %v831 = vpack.c.b16 %v818, %v817
        %v832 = vpack.c.b16 %v820, %v819
        %v833 = vpack.c.b16 %v822, %v821
        %v834 = vpack.c.b16 %v824, %v823
        %v835 = vpack.c.b16 %v826, %v825
        %v836 = vpack.c.b16 %v828, %v827
        %845 = vmatprep.subr.bf16.mxu0 0
        %846 = vmatpush1.bf16.msra.mxu0 %v829
        %847 = vmatprep.subr.bf16.mxu0 0
        %848 = vmatpush1.bf16.msra.mxu0 %v830
        %849 = vmatprep.subr.bf16.mxu0 0
        %850 = vmatpush1.bf16.msra.mxu0 %v831
        %851 = vmatprep.subr.bf16.mxu0 0
        %852 = vmatpush1.bf16.msra.mxu0 %v832
        %853 = vmatprep.subr.bf16.mxu0 0
        %854 = vmatpush1.bf16.msra.mxu0 %v833
        %855 = vmatprep.subr.bf16.mxu0 0
        %856 = vmatpush1.bf16.msra.mxu0 %v834
        %857 = vmatprep.subr.bf16.mxu0 0
        %858 = vmatpush1.bf16.msra.mxu0 %v835
        %859 = vmatprep.subr.bf16.mxu0 0
        %860 = vmatpush1.bf16.msra.mxu0 %v836
        %861 = vmatprep.subr.bf16.mxu0 0
        %862 = vmatpush1.bf16.msra.mxu0 0
        %863 = vmatprep.subr.bf16.mxu0 0
        %864 = vmatpush1.bf16.msra.mxu0 0
        %865 = vmatprep.subr.bf16.mxu0 0
        %866 = vmatpush1.bf16.msra.mxu0 0
        %867 = vmatprep.subr.bf16.mxu0 0
        %868 = vmatpush1.bf16.msra.mxu0 0
        %869 = vmatprep.subr.bf16.mxu0 0
        %870 = vmatpush1.bf16.msra.mxu0 0
        %871 = vmatprep.subr.bf16.mxu0 0
        %872 = vmatpush1.bf16.msra.mxu0 0
        %873 = vmatprep.subr.bf16.mxu0 0
        %874 = vmatpush1.bf16.msra.mxu0 0
        %875 = vmatprep.subr.bf16.mxu0 0
        %876 = vmatpush1.bf16.msra.mxu0 0
        %877 = vmatprep.mubr.bf16.mxu0 0
        %878 = vmatmul.mubr.bf16.gmra.mrb[0].mxu0 %v766
        %v879 = vpop.f32.mrb[0].mxu0
        %v880 = vadd.f32 %v795, %v879
        %v881 = vpop.f32.mrb[0].mxu0
        %v882 = vpop.f32.mrb[0].mxu0
        %v883 = vadd.f32 %v795, %v882
        %v884 = vpop.f32.mrb[0].mxu0
        %885 = vmatprep.mubr.bf16.mxu0 0
        %886 = vmatmul.mubr.bf16.gmra.mrb[0].mxu0 %v767
        %v887 = vpop.f32.mrb[0].mxu0
        %v888 = vadd.f32 %v795, %v887
        %v889 = vpop.f32.mrb[0].mxu0
        %v890 = vpop.f32.mrb[0].mxu0
        %v891 = vadd.f32 %v795, %v890
        %v892 = vpop.f32.mrb[0].mxu0
        %893 = vmatprep.mubr.bf16.mxu0 0
        %894 = vmatmul.mubr.bf16.gmra.mrb[0].mxu0 %v768
        %v895 = vpop.f32.mrb[0].mxu0
        %v896 = vadd.f32 %v795, %v895
        %v897 = vpop.f32.mrb[0].mxu0
        %v898 = vpop.f32.mrb[0].mxu0
        %v899 = vadd.f32 %v795, %v898
        %v900 = vpop.f32.mrb[0].mxu0
        %901 = vmatprep.mubr.bf16.mxu0 0
        %902 = vmatmul.mubr.bf16.gmra.mrb[0].mxu0 %v769
        %v903 = vpop.f32.mrb[0].mxu0
        %v904 = vadd.f32 %v795, %v903
        %v905 = vpop.f32.mrb[0].mxu0
        %v906 = vpop.f32.mrb[0].mxu0
        %v907 = vadd.f32 %v795, %v906
        %v908 = vpop.f32.mrb[0].mxu0
        %909 = vmatprep.mubr.bf16.mxu0 0
        %910 = vmatmul.mubr.bf16.gmra.mrb[0].mxu0 %v770
        %v911 = vpop.f32.mrb[0].mxu0
        %v912 = vadd.f32 %v795, %v911
        %v913 = vpop.f32.mrb[0].mxu0
        %v914 = vpop.f32.mrb[0].mxu0
        %v915 = vadd.f32 %v795, %v914
        %v916 = vpop.f32.mrb[0].mxu0
        %917 = vmatprep.mubr.bf16.mxu0 0
        %918 = vmatmul.mubr.bf16.gmra.mrb[0].mxu0 %v771
        %v919 = vpop.f32.mrb[0].mxu0
        %v920 = vadd.f32 %v795, %v919
        %v921 = vpop.f32.mrb[0].mxu0
        %v922 = vpop.f32.mrb[0].mxu0
        %v923 = vadd.f32 %v795, %v922
        %v924 = vpop.f32.mrb[0].mxu0
        %925 = vmatprep.mubr.bf16.mxu0 0
        %926 = vmatmul.mubr.bf16.gmra.mrb[0].mxu0 %v772
        %v927 = vpop.f32.mrb[0].mxu0
        %v928 = vadd.f32 %v795, %v927
        %v929 = vpop.f32.mrb[0].mxu0
        %v930 = vpop.f32.mrb[0].mxu0
        %v931 = vadd.f32 %v795, %v930
        %v932 = vpop.f32.mrb[0].mxu0
        %933 = vmatprep.mubr.bf16.mxu0 0
        %934 = vmatmul.mubr.bf16.gmra.mrb[0].mxu0 %v773
        %v935 = vpop.f32.mrb[0].mxu0
        %v936 = vadd.f32 %v795, %v935
        %v937 = vpop.f32.mrb[0].mxu0
        %v938 = vpop.f32.mrb[0].mxu0
        %v939 = vadd.f32 %v795, %v938
        %v940 = vpop.f32.mrb[0].mxu0
        %941 = vdwg.mxu0
        %v942 = vmax.f32 %v880, 0.0
        %v943 = vmax.f32 %v883, 0.0
        %v944 = vmax.f32 %v888, 0.0
        %v945 = vmax.f32 %v891, 0.0
        %v946 = vmax.f32 %v896, 0.0
        %v947 = vmax.f32 %v899, 0.0
        %v948 = vmax.f32 %v904, 0.0
        %v949 = vmax.f32 %v907, 0.0
        %v950 = vmax.f32 %v912, 0.0
        %v951 = vmax.f32 %v915, 0.0
        %v952 = vmax.f32 %v920, 0.0
        %v953 = vmax.f32 %v923, 0.0
        %v954 = vmax.f32 %v928, 0.0
        %v955 = vmax.f32 %v931, 0.0
        %v956 = vmax.f32 %v936, 0.0
        %v957 = vmax.f32 %v939, 0.0
        %v958 = vpack.c.bf16 %v943, %v942
        %v959 = vpack.c.bf16 %v945, %v944
        %v960 = vpack.c.bf16 %v947, %v946
        %v961 = vpack.c.bf16 %v949, %v948
        %v962 = vpack.c.bf16 %v951, %v950
        %v963 = vpack.c.bf16 %v953, %v952
        %v964 = vpack.c.bf16 %v955, %v954
        %v965 = vpack.c.bf16 %v957, %v956
        %966 = vmatprep.subr.bf16.mxu0 0
        %967 = vmatpush1.bf16.msra.mxu0 %v958
        %968 = vmatprep.subr.bf16.mxu0 0
        %969 = vmatpush1.bf16.msra.mxu0 %v959
        %970 = vmatprep.subr.bf16.mxu0 0
        %971 = vmatpush1.bf16.msra.mxu0 %v960
        %972 = vmatprep.subr.bf16.mxu0 0
        %973 = vmatpush1.bf16.msra.mxu0 %v961
        %974 = vmatprep.subr.bf16.mxu0 0
        %975 = vmatpush1.bf16.msra.mxu0 %v962
        %976 = vmatprep.subr.bf16.mxu0 0
        %977 = vmatpush1.bf16.msra.mxu0 %v963
        %978 = vmatprep.subr.bf16.mxu0 0
        %979 = vmatpush1.bf16.msra.mxu0 %v964
        %980 = vmatprep.subr.bf16.mxu0 0
        %981 = vmatpush1.bf16.msra.mxu0 %v965
        %982 = vmatprep.subr.bf16.mxu0 0
        %983 = vmatpush1.bf16.msra.mxu0 0
        %984 = vmatprep.subr.bf16.mxu0 0
        %985 = vmatpush1.bf16.msra.mxu0 0
        %986 = vmatprep.subr.bf16.mxu0 0
        %987 = vmatpush1.bf16.msra.mxu0 0
        %988 = vmatprep.subr.bf16.mxu0 0
        %989 = vmatpush1.bf16.msra.mxu0 0
        %990 = vmatprep.subr.bf16.mxu0 0
        %991 = vmatpush1.bf16.msra.mxu0 0
        %992 = vmatprep.subr.bf16.mxu0 0
        %993 = vmatpush1.bf16.msra.mxu0 0
        %994 = vmatprep.subr.bf16.mxu0 0
        %995 = vmatpush1.bf16.msra.mxu0 0
        %996 = vmatprep.subr.bf16.mxu0 0
        %997 = vmatpush1.bf16.msra.mxu0 0
        %998 = vmatprep.mubr.bf16.mxu0 0
        %999 = vmatmul.mubr.bf16.gmra.mrb[0].mxu0 %v605
        %v1000 = vpop.f32.mrb[0].mxu0
        %v1001 = vadd.f32 0.0, %v1000
        %v1002 = vpop.f32.mrb[0].mxu0
        %v1003 = vpop.f32.mrb[0].mxu0
        %v1004 = vadd.f32 0.0, %v1003
        %v1005 = vpop.f32.mrb[0].mxu0
        %1006 = vmatprep.mubr.bf16.mxu0 0
        %1007 = vmatmul.mubr.bf16.gmra.mrb[0].mxu0 %v606
        %v1008 = vpop.f32.mrb[0].mxu0
        %v1009 = vadd.f32 0.0, %v1008
        %v1010 = vpop.f32.mrb[0].mxu0
        %v1011 = vpop.f32.mrb[0].mxu0
        %v1012 = vadd.f32 0.0, %v1011
        %v1013 = vpop.f32.mrb[0].mxu0
        %1014 = vmatprep.mubr.bf16.mxu0 0
        %1015 = vmatmul.mubr.bf16.gmra.mrb[0].mxu0 %v607
        %v1016 = vpop.f32.mrb[0].mxu0
        %v1017 = vadd.f32 0.0, %v1016
        %v1018 = vpop.f32.mrb[0].mxu0
        %v1019 = vpop.f32.mrb[0].mxu0
        %v1020 = vadd.f32 0.0, %v1019
        %v1021 = vpop.f32.mrb[0].mxu0
        %1022 = vmatprep.mubr.bf16.mxu0 0
        %1023 = vmatmul.mubr.bf16.gmra.mrb[0].mxu0 %v608
        %v1024 = vpop.f32.mrb[0].mxu0
        %v1025 = vadd.f32 0.0, %v1024
        %v1026 = vpop.f32.mrb[0].mxu0
        %v1027 = vpop.f32.mrb[0].mxu0
        %v1028 = vadd.f32 0.0, %v1027
        %v1029 = vpop.f32.mrb[0].mxu0
        %1030 = vmatprep.mubr.bf16.mxu0 0
        %1031 = vmatmul.mubr.bf16.gmra.mrb[0].mxu0 %v609
        %v1032 = vpop.f32.mrb[0].mxu0
        %v1033 = vadd.f32 0.0, %v1032
        %v1034 = vpop.f32.mrb[0].mxu0
        %v1035 = vpop.f32.mrb[0].mxu0
        %v1036 = vadd.f32 0.0, %v1035
        %v1037 = vpop.f32.mrb[0].mxu0
        %1038 = vmatprep.mubr.bf16.mxu0 0
        %1039 = vmatmul.mubr.bf16.gmra.mrb[0].mxu0 %v610
        %v1040 = vpop.f32.mrb[0].mxu0
        %v1041 = vadd.f32 0.0, %v1040
        %v1042 = vpop.f32.mrb[0].mxu0
        %v1043 = vpop.f32.mrb[0].mxu0
        %v1044 = vadd.f32 0.0, %v1043
        %v1045 = vpop.f32.mrb[0].mxu0
        %1046 = vmatprep.mubr.bf16.mxu0 0
        %1047 = vmatmul.mubr.bf16.gmra.mrb[0].mxu0 %v611
        %v1048 = vpop.f32.mrb[0].mxu0
        %v1049 = vadd.f32 0.0, %v1048
        %v1050 = vpop.f32.mrb[0].mxu0
        %v1051 = vpop.f32.mrb[0].mxu0
        %v1052 = vadd.f32 0.0, %v1051
        %v1053 = vpop.f32.mrb[0].mxu0
        %1054 = vmatprep.mubr.bf16.mxu0 0
        %1055 = vmatmul.mubr.bf16.gmra.mrb[0].mxu0 %v612
        %v1056 = vpop.f32.mrb[0].mxu0
        %v1057 = vadd.f32 0.0, %v1056
        %v1058 = vpop.f32.mrb[0].mxu0
        %v1059 = vpop.f32.mrb[0].mxu0
        %v1060 = vadd.f32 0.0, %v1059
        %v1061 = vpop.f32.mrb[0].mxu0
        %1062 = vdwg.mxu0
        %v1063 = vpack.c.bf16 %v1004, %v1001
        %v1064 = vpack.c.bf16 %v1012, %v1009
        %v1065 = vpack.c.bf16 %v1020, %v1017
        %v1066 = vpack.c.bf16 %v1028, %v1025
        %v1067 = vpack.c.bf16 %v1036, %v1033
        %v1068 = vpack.c.bf16 %v1044, %v1041
        %v1069 = vpack.c.bf16 %v1052, %v1049
        %v1070 = vpack.c.bf16 %v1060, %v1057
        %v1071 = vld [vmem:[#allocation7] sm:$0xf]
        %v1072 = vld [vmem:[#allocation7 + $0x4] sm:$0xf]
        %v1073 = vld [vmem:[#allocation7 + $0x8] sm:$0xf]
        %v1074 = vld [vmem:[#allocation7 + $0xc] sm:$0xf]
        %v1075 = vld [vmem:[#allocation7 + $0x10] sm:$0xf]
        %v1076 = vld [vmem:[#allocation7 + $0x14] sm:$0xf]
        %v1077 = vld [vmem:[#allocation7 + $0x18] sm:$0xf]
        %v1078 = vld [vmem:[#allocation7 + $0x1c] sm:$0xf]
        %v1079 = vld [vmem:[#allocation7 + $0x20] sm:$0xf]
        %v1080 = vld [vmem:[#allocation7 + $0x24] sm:$0xf]
        %v1081 = vld [vmem:[#allocation7 + $0x28] sm:$0xf]
        %v1082 = vld [vmem:[#allocation7 + $0x2c] sm:$0xf]
        %v1083 = vld [vmem:[#allocation7 + $0x30] sm:$0xf]
        %v1084 = vld [vmem:[#allocation7 + $0x34] sm:$0xf]
        %v1085 = vld [vmem:[#allocation7 + $0x38] sm:$0xf]
        %v1086 = vld [vmem:[#allocation7 + $0x3c] sm:$0xf]
        %v1087 = vld [vmem:[%s6] sm:$0x1]
        %v1089 = vlaneseq
        %v1090 = vshrl.u32 %v1089, 7
        %v1091 = vsub.s32 0, %v1090
        %v1092 = vrot.slane %v1087, %v1091
        %v1110 = vunpack.c.l.b16 %v1071
        %v1111 = vunpack.c.l.b16 %v1072
        %v1112 = vunpack.c.l.b16 %v1073
        %v1113 = vunpack.c.l.b16 %v1074
        %v1114 = vunpack.c.l.b16 %v1075
        %v1115 = vunpack.c.l.b16 %v1076
        %v1116 = vunpack.c.l.b16 %v1077
        %v1117 = vunpack.c.l.b16 %v1078
        %v1118 = vunpack.c.l.b16 %v1079
        %v1119 = vunpack.c.l.b16 %v1080
        %v1120 = vunpack.c.l.b16 %v1081
        %v1121 = vunpack.c.l.b16 %v1082
        %v1122 = vunpack.c.l.b16 %v1083
        %v1123 = vunpack.c.l.b16 %v1084
        %v1124 = vunpack.c.l.b16 %v1085
        %v1125 = vunpack.c.l.b16 %v1086
        %v1126 = vpack.c.b16 %v1111, %v1110
        %v1127 = vpack.c.b16 %v1113, %v1112
        %v1128 = vpack.c.b16 %v1115, %v1114
        %v1129 = vpack.c.b16 %v1117, %v1116
        %v1130 = vpack.c.b16 %v1119, %v1118
        %v1131 = vpack.c.b16 %v1121, %v1120
        %v1132 = vpack.c.b16 %v1123, %v1122
        %v1133 = vpack.c.b16 %v1125, %v1124
        %1142 = vmatprep.subr.bf16.mxu0 0
        %1143 = vmatpush1.bf16.msra.mxu0 %v1126
        %1144 = vmatprep.subr.bf16.mxu0 0
        %1145 = vmatpush1.bf16.msra.mxu0 %v1127
        %1146 = vmatprep.subr.bf16.mxu0 0
        %1147 = vmatpush1.bf16.msra.mxu0 %v1128
        %1148 = vmatprep.subr.bf16.mxu0 0
        %1149 = vmatpush1.bf16.msra.mxu0 %v1129
        %1150 = vmatprep.subr.bf16.mxu0 0
        %1151 = vmatpush1.bf16.msra.mxu0 %v1130
        %1152 = vmatprep.subr.bf16.mxu0 0
        %1153 = vmatpush1.bf16.msra.mxu0 %v1131
        %1154 = vmatprep.subr.bf16.mxu0 0
        %1155 = vmatpush1.bf16.msra.mxu0 %v1132
        %1156 = vmatprep.subr.bf16.mxu0 0
        %1157 = vmatpush1.bf16.msra.mxu0 %v1133
        %1158 = vmatprep.subr.bf16.mxu0 0
        %1159 = vmatpush1.bf16.msra.mxu0 0
        %1160 = vmatprep.subr.bf16.mxu0 0
        %1161 = vmatpush1.bf16.msra.mxu0 0
        %1162 = vmatprep.subr.bf16.mxu0 0
        %1163 = vmatpush1.bf16.msra.mxu0 0
        %1164 = vmatprep.subr.bf16.mxu0 0
        %1165 = vmatpush1.bf16.msra.mxu0 0
        %1166 = vmatprep.subr.bf16.mxu0 0
        %1167 = vmatpush1.bf16.msra.mxu0 0
        %1168 = vmatprep.subr.bf16.mxu0 0
        %1169 = vmatpush1.bf16.msra.mxu0 0
        %1170 = vmatprep.subr.bf16.mxu0 0
        %1171 = vmatpush1.bf16.msra.mxu0 0
        %1172 = vmatprep.subr.bf16.mxu0 0
        %1173 = vmatpush1.bf16.msra.mxu0 0
        %1174 = vmatprep.mubr.bf16.mxu0 0
        %1175 = vmatmul.mubr.bf16.gmra.mrb[0].mxu0 %v1063
        %v1176 = vpop.f32.mrb[0].mxu0
        %v1177 = vadd.f32 %v1092, %v1176
        %v1178 = vpop.f32.mrb[0].mxu0
        %v1179 = vpop.f32.mrb[0].mxu0
        %v1180 = vadd.f32 %v1092, %v1179
        %v1181 = vpop.f32.mrb[0].mxu0
        %1182 = vmatprep.mubr.bf16.mxu0 0
        %1183 = vmatmul.mubr.bf16.gmra.mrb[0].mxu0 %v1064
        %v1184 = vpop.f32.mrb[0].mxu0
        %v1185 = vadd.f32 %v1092, %v1184
        %v1186 = vpop.f32.mrb[0].mxu0
        %v1187 = vpop.f32.mrb[0].mxu0
        %v1188 = vadd.f32 %v1092, %v1187
        %v1189 = vpop.f32.mrb[0].mxu0
        %1190 = vmatprep.mubr.bf16.mxu0 0
        %1191 = vmatmul.mubr.bf16.gmra.mrb[0].mxu0 %v1065
        %v1192 = vpop.f32.mrb[0].mxu0
        %v1193 = vadd.f32 %v1092, %v1192
        %v1194 = vpop.f32.mrb[0].mxu0
        %v1195 = vpop.f32.mrb[0].mxu0
        %v1196 = vadd.f32 %v1092, %v1195
        %v1197 = vpop.f32.mrb[0].mxu0
        %1198 = vmatprep.mubr.bf16.mxu0 0
        %1199 = vmatmul.mubr.bf16.gmra.mrb[0].mxu0 %v1066
        %v1200 = vpop.f32.mrb[0].mxu0
        %v1201 = vadd.f32 %v1092, %v1200
        %v1202 = vpop.f32.mrb[0].mxu0
        %v1203 = vpop.f32.mrb[0].mxu0
        %v1204 = vadd.f32 %v1092, %v1203
        %v1205 = vpop.f32.mrb[0].mxu0
        %1206 = vmatprep.mubr.bf16.mxu0 0
        %1207 = vmatmul.mubr.bf16.gmra.mrb[0].mxu0 %v1067
        %v1208 = vpop.f32.mrb[0].mxu0
        %v1209 = vadd.f32 %v1092, %v1208
        %v1210 = vpop.f32.mrb[0].mxu0
        %v1211 = vpop.f32.mrb[0].mxu0
        %v1212 = vadd.f32 %v1092, %v1211
        %v1213 = vpop.f32.mrb[0].mxu0
        %1214 = vmatprep.mubr.bf16.mxu0 0
        %1215 = vmatmul.mubr.bf16.gmra.mrb[0].mxu0 %v1068
        %v1216 = vpop.f32.mrb[0].mxu0
        %v1217 = vadd.f32 %v1092, %v1216
        %v1218 = vpop.f32.mrb[0].mxu0
        %v1219 = vpop.f32.mrb[0].mxu0
        %v1220 = vadd.f32 %v1092, %v1219
        %v1221 = vpop.f32.mrb[0].mxu0
        %1222 = vmatprep.mubr.bf16.mxu0 0
        %1223 = vmatmul.mubr.bf16.gmra.mrb[0].mxu0 %v1069
        %v1224 = vpop.f32.mrb[0].mxu0
        %v1225 = vadd.f32 %v1092, %v1224
        %v1226 = vpop.f32.mrb[0].mxu0
        %v1227 = vpop.f32.mrb[0].mxu0
        %v1228 = vadd.f32 %v1092, %v1227
        %v1229 = vpop.f32.mrb[0].mxu0
        %1230 = vmatprep.mubr.bf16.mxu0 0
        %1231 = vmatmul.mubr.bf16.gmra.mrb[0].mxu0 %v1070
        %v1232 = vpop.f32.mrb[0].mxu0
        %v1233 = vadd.f32 %v1092, %v1232
        %v1234 = vpop.f32.mrb[0].mxu0
        %v1235 = vpop.f32.mrb[0].mxu0
        %v1236 = vadd.f32 %v1092, %v1235
        %v1237 = vpop.f32.mrb[0].mxu0
        %1238 = vdwg.mxu0
        %v1239 = vmax.f32 %v1177, 0.0
        %v1240 = vmax.f32 %v1180, 0.0
        %v1241 = vmax.f32 %v1185, 0.0
        %v1242 = vmax.f32 %v1188, 0.0
        %v1243 = vmax.f32 %v1193, 0.0
        %v1244 = vmax.f32 %v1196, 0.0
        %v1245 = vmax.f32 %v1201, 0.0
        %v1246 = vmax.f32 %v1204, 0.0
        %v1247 = vmax.f32 %v1209, 0.0
        %v1248 = vmax.f32 %v1212, 0.0
        %v1249 = vmax.f32 %v1217, 0.0
        %v1250 = vmax.f32 %v1220, 0.0
        %v1251 = vmax.f32 %v1225, 0.0
        %v1252 = vmax.f32 %v1228, 0.0
        %v1253 = vmax.f32 %v1233, 0.0
        %v1254 = vmax.f32 %v1236, 0.0
        %v1255 = vpack.c.bf16 %v1240, %v1239
        %v1256 = vpack.c.bf16 %v1242, %v1241
        %v1257 = vpack.c.bf16 %v1244, %v1243
        %v1258 = vpack.c.bf16 %v1246, %v1245
        %v1259 = vpack.c.bf16 %v1248, %v1247
        %v1260 = vpack.c.bf16 %v1250, %v1249
        %v1261 = vpack.c.bf16 %v1252, %v1251
        %v1262 = vpack.c.bf16 %v1254, %v1253
        %v1263 = vld [vmem:[%s535] sm:$0xf]
        %1264 = vmatprep.subr.bf16.mxu0 0
        %1265 = vmatpush1.bf16.msra.mxu0 %v1255
        %1266 = vmatprep.subr.bf16.mxu0 0
        %1267 = vmatpush1.bf16.msra.mxu0 %v1256
        %1268 = vmatprep.subr.bf16.mxu0 0
        %1269 = vmatpush1.bf16.msra.mxu0 %v1257
        %1270 = vmatprep.subr.bf16.mxu0 0
        %1271 = vmatpush1.bf16.msra.mxu0 %v1258
        %1272 = vmatprep.subr.bf16.mxu0 0
        %1273 = vmatpush1.bf16.msra.mxu0 %v1259
        %1274 = vmatprep.subr.bf16.mxu0 0
        %1275 = vmatpush1.bf16.msra.mxu0 %v1260
        %1276 = vmatprep.subr.bf16.mxu0 0
        %1277 = vmatpush1.bf16.msra.mxu0 %v1261
        %1278 = vmatprep.subr.bf16.mxu0 0
        %1279 = vmatpush1.bf16.msra.mxu0 %v1262
        %1280 = vmatprep.subr.bf16.mxu0 0
        %1281 = vmatpush1.bf16.msra.mxu0 0
        %1282 = vmatprep.subr.bf16.mxu0 0
        %1283 = vmatpush1.bf16.msra.mxu0 0
        %1284 = vmatprep.subr.bf16.mxu0 0
        %1285 = vmatpush1.bf16.msra.mxu0 0
        %1286 = vmatprep.subr.bf16.mxu0 0
        %1287 = vmatpush1.bf16.msra.mxu0 0
        %1288 = vmatprep.subr.bf16.mxu0 0
        %1289 = vmatpush1.bf16.msra.mxu0 0
        %1290 = vmatprep.subr.bf16.mxu0 0
        %1291 = vmatpush1.bf16.msra.mxu0 0
        %1292 = vmatprep.subr.bf16.mxu0 0
        %1293 = vmatpush1.bf16.msra.mxu0 0
        %1294 = vmatprep.subr.bf16.mxu0 0
        %1295 = vmatpush1.bf16.msra.mxu0 0
        %1296 = vmatprep.mubr.bf16.mxu0 0
        %1297 = vmatmul.mubr.bf16.gmra.mrb[0].mxu0 %v1263
        %v1298 = vpop.f32.mrb[0].mxu0
        %v1299 = vadd.f32 0.0, %v1298
        %v1300 = vpop.f32.mrb[0].mxu0
        %v1301 = vpop.f32.mrb[0].mxu0
        %v1302 = vpop.f32.mrb[0].mxu0
        %1303 = vdwg.mxu0
        %v1304 = vpack.c.bf16 %v1299, %v1299
        %v1305 = vld [vmem:[#allocation9] sm:$0xf]
        %v1306 = vld [vmem:[#allocation9 + $0x4] sm:$0xf]
        %v1307 = vld [vmem:[#allocation9 + $0x8] sm:$0xf]
        %v1308 = vld [vmem:[#allocation9 + $0xc] sm:$0xf]
        %v1309 = vld [vmem:[#allocation9 + $0x10] sm:$0xf]
        %v1310 = vld [vmem:[#allocation9 + $0x14] sm:$0xf]
        %v1311 = vld [vmem:[#allocation9 + $0x18] sm:$0xf]
        %v1312 = vld [vmem:[#allocation9 + $0x1c] sm:$0xf]
        %v1313 = vld [vmem:[#allocation9 + $0x20] sm:$0xf]
        %v1314 = vld [vmem:[#allocation9 + $0x24] sm:$0xf]
        %v1315 = vld [vmem:[#allocation9 + $0x28] sm:$0xf]
        %v1316 = vld [vmem:[#allocation9 + $0x2c] sm:$0xf]
        %v1317 = vld [vmem:[#allocation9 + $0x30] sm:$0xf]
        %v1318 = vld [vmem:[#allocation9 + $0x34] sm:$0xf]
        %v1319 = vld [vmem:[#allocation9 + $0x38] sm:$0xf]
        %v1320 = vld [vmem:[#allocation9 + $0x3c] sm:$0xf]
        %v1321 = vld [vmem:[%s8] sm:$0x1]
        %v1323 = vlaneseq
        %v1324 = vshrl.u32 %v1323, 7
        %v1325 = vsub.s32 0, %v1324
        %v1326 = vrot.slane %v1321, %v1325
        %v1344 = vunpack.c.l.b16 %v1305
        %v1345 = vunpack.c.l.b16 %v1306
        %v1346 = vunpack.c.l.b16 %v1307
        %v1347 = vunpack.c.l.b16 %v1308
        %v1348 = vunpack.c.l.b16 %v1309
        %v1349 = vunpack.c.l.b16 %v1310
        %v1350 = vunpack.c.l.b16 %v1311
        %v1351 = vunpack.c.l.b16 %v1312
        %v1352 = vunpack.c.l.b16 %v1313
        %v1353 = vunpack.c.l.b16 %v1314
        %v1354 = vunpack.c.l.b16 %v1315
        %v1355 = vunpack.c.l.b16 %v1316
        %v1356 = vunpack.c.l.b16 %v1317
        %v1357 = vunpack.c.l.b16 %v1318
        %v1358 = vunpack.c.l.b16 %v1319
        %v1359 = vunpack.c.l.b16 %v1320
        %v1360 = vpack.c.b16 %v1345, %v1344
        %v1361 = vpack.c.b16 %v1347, %v1346
        %v1362 = vpack.c.b16 %v1349, %v1348
        %v1363 = vpack.c.b16 %v1351, %v1350
        %v1364 = vpack.c.b16 %v1353, %v1352
        %v1365 = vpack.c.b16 %v1355, %v1354
        %v1366 = vpack.c.b16 %v1357, %v1356
        %v1367 = vpack.c.b16 %v1359, %v1358
        %1376 = vmatprep.subr.bf16.mxu0 0
        %1377 = vmatpush1.bf16.msra.mxu0 %v1360
        %1378 = vmatprep.subr.bf16.mxu0 0
        %1379 = vmatpush1.bf16.msra.mxu0 %v1361
        %1380 = vmatprep.subr.bf16.mxu0 0
        %1381 = vmatpush1.bf16.msra.mxu0 %v1362
        %1382 = vmatprep.subr.bf16.mxu0 0
        %1383 = vmatpush1.bf16.msra.mxu0 %v1363
        %1384 = vmatprep.subr.bf16.mxu0 0
        %1385 = vmatpush1.bf16.msra.mxu0 %v1364
        %1386 = vmatprep.subr.bf16.mxu0 0
        %1387 = vmatpush1.bf16.msra.mxu0 %v1365
        %1388 = vmatprep.subr.bf16.mxu0 0
        %1389 = vmatpush1.bf16.msra.mxu0 %v1366
        %1390 = vmatprep.subr.bf16.mxu0 0
        %1391 = vmatpush1.bf16.msra.mxu0 %v1367
        %1392 = vmatprep.subr.bf16.mxu0 0
        %1393 = vmatpush1.bf16.msra.mxu0 0
        %1394 = vmatprep.subr.bf16.mxu0 0
        %1395 = vmatpush1.bf16.msra.mxu0 0
        %1396 = vmatprep.subr.bf16.mxu0 0
        %1397 = vmatpush1.bf16.msra.mxu0 0
        %1398 = vmatprep.subr.bf16.mxu0 0
        %1399 = vmatpush1.bf16.msra.mxu0 0
        %1400 = vmatprep.subr.bf16.mxu0 0
        %1401 = vmatpush1.bf16.msra.mxu0 0
        %1402 = vmatprep.subr.bf16.mxu0 0
        %1403 = vmatpush1.bf16.msra.mxu0 0
        %1404 = vmatprep.subr.bf16.mxu0 0
        %1405 = vmatpush1.bf16.msra.mxu0 0
        %1406 = vmatprep.subr.bf16.mxu0 0
        %1407 = vmatpush1.bf16.msra.mxu0 0
        %1408 = vmatprep.mubr.bf16.mxu0 0
        %1409 = vmatmul.mubr.bf16.gmra.mrb[0].mxu0 %v1304
        %v1410 = vpop.f32.mrb[0].mxu0
        %v1411 = vadd.f32 %v1326, %v1410
        %v1412 = vpop.f32.mrb[0].mxu0
        %v1413 = vpop.f32.mrb[0].mxu0
        %v1414 = vpop.f32.mrb[0].mxu0
        %1415 = vdwg.mxu0
        %v1416 = vmax.f32 %v1411, 0.0
        %v1417 = vpack.c.bf16 %v1416, %v1416
        %v1418 = vld [vmem:[#allocation10] sm:$0xf]
        %v1419 = vld [vmem:[#allocation10 + $0x4] sm:$0xf]
        %v1420 = vld [vmem:[#allocation10 + $0x8] sm:$0xf]
        %v1421 = vld [vmem:[#allocation10 + $0xc] sm:$0xf]
        %v1422 = vld [vmem:[#allocation10 + $0x10] sm:$0xf]
        %v1423 = vld [vmem:[#allocation10 + $0x14] sm:$0xf]
        %v1424 = vld [vmem:[#allocation10 + $0x18] sm:$0xf]
        %v1425 = vld [vmem:[#allocation10 + $0x1c] sm:$0xf]
        %v1426 = vld [vmem:[#allocation10 + $0x20] sm:$0xf]
        %v1427 = vld [vmem:[#allocation10 + $0x24] sm:$0xf]
        %v1428 = vld [vmem:[#allocation10 + $0x28] sm:$0xf]
        %v1429 = vld [vmem:[#allocation10 + $0x2c] sm:$0xf]
        %v1430 = vld [vmem:[#allocation10 + $0x30] sm:$0xf]
        %v1431 = vld [vmem:[#allocation10 + $0x34] sm:$0xf]
        %v1432 = vld [vmem:[#allocation10 + $0x38] sm:$0xf]
        %v1433 = vld [vmem:[#allocation10 + $0x3c] sm:$0xf]
        %v1434 = vld [vmem:[%s10] sm:$0x1]
        %v1436 = vlaneseq
        %v1437 = vshrl.u32 %v1436, 7
        %v1438 = vsub.s32 0, %v1437
        %v1439 = vrot.slane %v1434, %v1438
        %v1457 = vunpack.c.l.b16 %v1418
        %v1458 = vunpack.c.l.b16 %v1419
        %v1459 = vunpack.c.l.b16 %v1420
        %v1460 = vunpack.c.l.b16 %v1421
        %v1461 = vunpack.c.l.b16 %v1422
        %v1462 = vunpack.c.l.b16 %v1423
        %v1463 = vunpack.c.l.b16 %v1424
        %v1464 = vunpack.c.l.b16 %v1425
        %v1465 = vunpack.c.l.b16 %v1426
        %v1466 = vunpack.c.l.b16 %v1427
        %v1467 = vunpack.c.l.b16 %v1428
        %v1468 = vunpack.c.l.b16 %v1429
        %v1469 = vunpack.c.l.b16 %v1430
        %v1470 = vunpack.c.l.b16 %v1431
        %v1471 = vunpack.c.l.b16 %v1432
        %v1472 = vunpack.c.l.b16 %v1433
        %v1473 = vpack.c.b16 %v1458, %v1457
        %v1474 = vpack.c.b16 %v1460, %v1459
        %v1475 = vpack.c.b16 %v1462, %v1461
        %v1476 = vpack.c.b16 %v1464, %v1463
        %v1477 = vpack.c.b16 %v1466, %v1465
        %v1478 = vpack.c.b16 %v1468, %v1467
        %v1479 = vpack.c.b16 %v1470, %v1469
        %v1480 = vpack.c.b16 %v1472, %v1471
        %1489 = vmatprep.subr.bf16.mxu0 0
        %1490 = vmatpush1.bf16.msra.mxu0 %v1473
        %1491 = vmatprep.subr.bf16.mxu0 0
        %1492 = vmatpush1.bf16.msra.mxu0 %v1474
        %1493 = vmatprep.subr.bf16.mxu0 0
        %1494 = vmatpush1.bf16.msra.mxu0 %v1475
        %1495 = vmatprep.subr.bf16.mxu0 0
        %1496 = vmatpush1.bf16.msra.mxu0 %v1476
        %1497 = vmatprep.subr.bf16.mxu0 0
        %1498 = vmatpush1.bf16.msra.mxu0 %v1477
        %1499 = vmatprep.subr.bf16.mxu0 0
        %1500 = vmatpush1.bf16.msra.mxu0 %v1478
        %1501 = vmatprep.subr.bf16.mxu0 0
        %1502 = vmatpush1.bf16.msra.mxu0 %v1479
        %1503 = vmatprep.subr.bf16.mxu0 0
        %1504 = vmatpush1.bf16.msra.mxu0 %v1480
        %1505 = vmatprep.subr.bf16.mxu0 0
        %1506 = vmatpush1.bf16.msra.mxu0 0
        %1507 = vmatprep.subr.bf16.mxu0 0
        %1508 = vmatpush1.bf16.msra.mxu0 0
        %1509 = vmatprep.subr.bf16.mxu0 0
        %1510 = vmatpush1.bf16.msra.mxu0 0
        %1511 = vmatprep.subr.bf16.mxu0 0
        %1512 = vmatpush1.bf16.msra.mxu0 0
        %1513 = vmatprep.subr.bf16.mxu0 0
        %1514 = vmatpush1.bf16.msra.mxu0 0
        %1515 = vmatprep.subr.bf16.mxu0 0
        %1516 = vmatpush1.bf16.msra.mxu0 0
        %1517 = vmatprep.subr.bf16.mxu0 0
        %1518 = vmatpush1.bf16.msra.mxu0 0
        %1519 = vmatprep.subr.bf16.mxu0 0
        %1520 = vmatpush1.bf16.msra.mxu0 0
        %1521 = vmatprep.mubr.bf16.mxu0 0
        %1522 = vmatmul.mubr.bf16.gmra.mrb[0].mxu0 %v1417
        %v1523 = vpop.f32.mrb[0].mxu0
        %v1524 = vadd.f32 %v1439, %v1523
        %v1525 = vpop.f32.mrb[0].mxu0
        %v1526 = vpop.f32.mrb[0].mxu0
        %v1527 = vpop.f32.mrb[0].mxu0
        %1528 = vdwg.mxu0
        %1529 = vst [vmem:[%s539] sm:$0xff] %v1524
        %p1530 = scmp.lt.s32.totalorder %s30, 1
        %s1531 = scalar_select %p1530, %s30, 1
        %s1532 = smul.addr %s1531, 8
        %s1533 = scalar_lea.vmem %s11, %s1532
        // Predicated region
        $region89: #{gcn_pallas_forward.1} parent=63 // pred_check
          %p1534 = pneg %p298
        $region90: #{gcn_pallas_forward.1} parent=63 // pred_check_branch
          %1536 = sbr.rel (%p1534) target = $region92
        $region91: #{gcn_pallas_forward.1} parent=63 // pred_region
          _
        $region92: #{gcn_pallas_forward.1} parent=63 // pred_fallthru
          _
      $region64: #{gcn_pallas_forward.1} parent=5 // pred_fallthru
        _
      %p1537 = scmp.le.s32.totalorder 2, %s25
      // Predicated region
      $region93: #{gcn_pallas_forward.1} parent=5 // pred_check
        %p1538 = pneg %p1537
      $region94: #{gcn_pallas_forward.1} parent=5 // pred_check_branch
        %1540 = sbr.rel (%p1538) target = $region96
      $region95: #{gcn_pallas_forward.1} parent=5 // pred_region
        %s1541 = ssub.s32 %s25, 2
        // Predicated region
        $region97: #{gcn_pallas_forward.1} parent=95 // pred_check
          %p1542 = pneg %p304
        $region98: #{gcn_pallas_forward.1} parent=95 // pred_check_branch
          %1544 = sbr.rel (%p1542) target = $region100
        $region99: #{gcn_pallas_forward.1} parent=95 // pred_region
          %p1545 = scmp.lt.s32.totalorder %s31, 1
          %s1546 = scalar_select %p1545, %s31, 1
          %s1547 = smul.addr %s1546, 8
          %s1548 = scalar_lea.vmem %s11, %s1547
        $region100: #{gcn_pallas_forward.1} parent=95 // pred_fallthru
          _
      $region96: #{gcn_pallas_forward.1} parent=5 // pred_fallthru
        _
    $region6: #{gcn_pallas_forward.1} parent=1 // loop_footer
      %s29 = sadd.s32 1, %s25
    $region7: #{gcn_pallas_forward.1} parent=1 // loop_footer_branch
      %24 = sbr.rel target = $region3
    $region8: #{gcn_pallas_forward.1} parent=1 // loop_exit
      _
    %1549 = vsyncpa [#allocation3], 1
    %s1550 = scalar_lea.sflag [#allocation3], 1
    %1551 = vsyncpa %s1550, 1
    %1552 = vsyncpa [#allocation5], 1
    %s1553 = scalar_lea.sflag [#allocation5], 1
    %1554 = vsyncpa %s1553, 1
    %1555 = vsyncpa [#allocation8], 1
    %1556 = vsyncpa [#allocation11], 1

</llo_original>
